<compile_context>
chip_gen: v5e
topology: v5e:2x2
jax: 0.10.0
libtpu: 0.0.40
codegen_flags: <defaults>
</compile_context>

<pallas_src>
import functools
import math

import jax
import jax.numpy as jnp
import numpy as np
from jax.experimental import pallas as pl
from jax.experimental.pallas import tpu as pltpu


# ---------------------------------------------------------------------------
# Fused layer kernel. One grid step == one batch element.
#   emb_ref : (nq, D)   learned query embeddings (shared across batch)
#   mem_ref : (Lk, D)   memory tokens for this batch element (K=V of attn 1)
#   enc_ref : (Lk, D)   encoder "out" tokens for this batch (K=V of attn 2)
#   *_wq_ref: (D, D)    Wq^T * 1/sqrt(dh)   (in, out)
#   *_wkv_ref:(D, 2D)   [Wk^T | Wv^T]       (in, out)
#   *_wo_ref: (D, D)    Wo^T                (in, out)
#   *_b_ref : (4, D)    rows = [bq*scale, bk, bv, bo]
#   ln*_ref : (2, D)    rows = [gamma, beta]
#   gw_ref  : (D, E)    gate W^T ;  gb_ref (1, E) gate bias
#   gexp_ref: (E, E*H)  0/1 block matrix replicating gate weights over H lanes
#   w1_ref  : (D, E*H)  stacked expert W1^T ; b1_ref (1, E*H)
#   w2_ref  : (E*H, D)  stacked expert W2^T ; b2_ref (E, D)
#   o_ref   : (nq, D)
# ---------------------------------------------------------------------------
def _share_de_layer_kernel(
        emb_ref, mem_ref, enc_ref,
        sa_wq_ref, sa_wkv_ref, sa_wo_ref, sa_b_ref,
        ca_wq_ref, ca_wkv_ref, ca_wo_ref, ca_b_ref,
        ln1_ref, ln2_ref,
        gw_ref, gb_ref, gexp_ref, w1_ref, b1_ref, w2_ref, b2_ref,
        o_ref, *, nhead, top_k, eps):
    f32 = jnp.float32
    nq, D = emb_ref.shape
    Lk = mem_ref.shape[0]
    dh = D // nhead

    def attention(q_tok, kv_tok, wq_ref, wkv_ref, wo_ref, b_ref):
        b4 = b_ref[...].astype(f32)
        # fused projections (weights pre-transposed to (in, out); scale folded)
        q = (jnp.dot(q_tok, wq_ref[...].astype(f32),
                     preferred_element_type=f32) + b4[0:1, :])
        kv = jnp.dot(kv_tok, wkv_ref[...].astype(f32),
                     preferred_element_type=f32)
        k = kv[:, :D] + b4[1:2, :]
        v = kv[:, D:] + b4[2:3, :]

        # Per-head scores (nhead small -> short unrolled loop), softmax done
        # ONCE on the head-stacked (nhead*nq, Lk) matrix.
        # TODO(synk): a fully batched head dot_general would need an in-kernel
        #             lane-splitting reshape (D -> nhead x dh); kept unrolled
        #             for Mosaic lowering safety at these tiny shapes.
        scores = []
        for h in range(nhead):
            sl = slice(h * dh, (h + 1) * dh)
            scores.append(jax.lax.dot_general(
                q[:, sl], k[:, sl], (((1,), (1,)), ((), ())),
                preferred_element_type=f32))                       # (nq, Lk)
        s_all = jnp.concatenate(scores, axis=0)                    # (nhead*nq, Lk)
        m = jnp.max(s_all, axis=-1, keepdims=True)
        p = jnp.exp(s_all - m)
        p = p / jnp.sum(p, axis=-1, keepdims=True)                 # exact softmax

        # Per-head context, merged along lanes; head-merge folded into ONE
        # (nq, D) @ (D, D) out-projection GEMM.
        ctxs = []
        for h in range(nhead):
            sl = slice(h * dh, (h + 1) * dh)
            ctxs.append(jnp.dot(p[h * nq:(h + 1) * nq, :], v[:, sl],
                                preferred_element_type=f32))       # (nq, dh)
        ctx = jnp.concatenate(ctxs, axis=1)                        # (nq, D)
        return (jnp.dot(ctx, wo_ref[...].astype(f32),
                        preferred_element_type=f32) + b4[3:4, :])

    def layer_norm(x, ln_ref):
        lnw = ln_ref[...].astype(f32)
        mu = jnp.mean(x, axis=-1, keepdims=True)
        xc = x - mu
        var = jnp.mean(xc * xc, axis=-1, keepdims=True)
        return xc * jax.lax.rsqrt(var + eps) * lnw[0:1, :] + lnw[1:2, :]

    emb = emb_ref[...].astype(f32)
    mem = mem_ref[...].astype(f32)
    enc = enc_ref[...].astype(f32)

    # stage 1: self_attn(q=learned_embed, k=v=memory) + dropout1(id) + norm1
    x1 = layer_norm(emb + attention(emb, mem, sa_wq_ref, sa_wkv_ref,
                                    sa_wo_ref, sa_b_ref), ln1_ref)
    # stage 2: multihead_attn(q=x1, k=v=out) + dropout2(id) + norm2
    x2 = layer_norm(x1 + attention(x1, enc, ca_wq_ref, ca_wkv_ref,
                                   ca_wo_ref, ca_b_ref), ln2_ref)

    # stage 3: MoE positionwise FF (NaiveGate top-k + stacked expert GEMMs)
    logits = (jnp.dot(x2, gw_ref[...].astype(f32),
                      preferred_element_type=f32)
              + gb_ref[...].astype(f32))                           # (nq, E)

    neg_inf = jnp.float32(-1e30)
    masked = logits
    kth = jnp.max(masked, axis=-1, keepdims=True)
    for _ in range(top_k - 1):
        masked = jnp.where(masked >= kth, neg_inf, masked)
        kth = jnp.max(masked, axis=-1, keepdims=True)
    # TODO(synk): exact duplicate logits can select more than top_k experts;
    #             torch.topk breaks ties by index order (measure-zero here).
    sel = logits >= kth
    z = jnp.where(sel, logits, neg_inf)
    zmax = jnp.max(z, axis=-1, keepdims=True)
    ez = jnp.where(sel, jnp.exp(z - zmax), 0.0)
    gate_w = ez / jnp.sum(ez, axis=-1, keepdims=True)              # (nq, E)

    h = (jnp.dot(x2, w1_ref[...].astype(f32), preferred_element_type=f32)
         + b1_ref[...].astype(f32))                                # (nq, E*H)
    h = jnp.maximum(h, 0.0)                    # ReLU (+Dropout = identity)
    gate_full = jnp.dot(gate_w, gexp_ref[...].astype(f32),
                        preferred_element_type=f32)                # (nq, E*H)
    y = (jnp.dot(h * gate_full, w2_ref[...].astype(f32),
                 preferred_element_type=f32)
         + jnp.dot(gate_w, b2_ref[...].astype(f32),
                   preferred_element_type=f32))                    # (nq, D)

    # CustomizedMoEPositionwiseFF with pre_lnorm=False: output = inp + core_out
    # (no LayerNorm on this branch per the reference module).
    o_ref[...] = (x2 + y).astype(o_ref.dtype)


# ---------------------------------------------------------------------------
# ShareDeLayer forward (normalize_before=False -> forward_post), 1 kernel.
# ---------------------------------------------------------------------------
def share_de_layer_forward(params, out, memory, *, nhead, moe_topk,
                           eps=1e-5, pos=None):
    # out, memory: (L, B, D) seq-first. Returns (num_queries, B, D).
    # TODO(synk): attn_mask / key_padding_mask / pos embedding not implemented
    #             (only the None path of forward_post is supported).
    assert pos is None
    Lk, B, D = memory.shape
    emb = params["learned_embed"]
    nq = emb.shape[0]
    sa, ca, moe = params["self_attn"], params["multihead_attn"], params["moe"]
    E = moe["b2"].shape[0]
    EH = moe["w1_all"].shape[1]
    dh = D // nhead

    # batch-first internal layout (cheap XLA transposes, once per input)
    mem_bf = jnp.transpose(memory, (1, 0, 2))     # (B, Lk, D)
    enc_bf = jnp.transpose(out, (1, 0, 2))        # (B, Lk, D)

    kern = functools.partial(_share_de_layer_kernel, nhead=nhead,
                             top_k=moe_topk, eps=eps)

    def full2(r, c):   # weight block, identical for every grid step
        return pl.BlockSpec((r, c), lambda b: (0, 0))

    def batch3(r, c):  # per-batch (squeezed leading dim) block
        return pl.BlockSpec((None, r, c), lambda b: (b, 0, 0))

    args = (emb, mem_bf, enc_bf,
            sa["wq_t"], sa["wkv_t"], sa["wo_t"], sa["bias4"],
            ca["wq_t"], ca["wkv_t"], ca["wo_t"], ca["bias4"],
            params["ln1"], params["ln2"],
            moe["gate_w_t"], moe["gate_b"], moe["gate_expand"],
            moe["w1_all"], moe["b1_all"], moe["w2_all"], moe["b2"])

    flops_attn = 2 * (nq * D * D            # q proj
                      + Lk * D * 2 * D      # kv proj
                      + 2 * nhead * nq * Lk * dh   # scores + context
                      + nq * D * D)         # out proj
    flops_moe = 2 * (nq * D * E + nq * D * EH + nq * E * EH
                     + nq * EH * D + nq * E * D)
    bytes_accessed = sum(int(np.prod(a.shape)) * a.dtype.itemsize for a in args)
    bytes_accessed += B * nq * D * memory.dtype.itemsize

    result = pl.pallas_call(
        kern,
        out_shape=jax.ShapeDtypeStruct((B, nq, D), memory.dtype),
        grid=(B,),
        in_specs=[
            full2(nq, D),                 # learned_embed (shared)
            batch3(Lk, D),                # memory[b]
            batch3(Lk, D),                # encoder out[b]
            full2(D, D), full2(D, 2 * D), full2(D, D), full2(4, D),   # self-attn
            full2(D, D), full2(D, 2 * D), full2(D, D), full2(4, D),   # cross-attn
            full2(2, D), full2(2, D),                                 # ln1, ln2
            full2(D, E), full2(1, E), full2(E, EH),                   # gate
            full2(D, EH), full2(1, EH), full2(EH, D), full2(E, D),    # experts
        ],
        out_specs=pl.BlockSpec((None, nq, D), lambda b: (b, 0, 0)),
        compiler_params=pltpu.CompilerParams(
            dimension_semantics=("parallel",)),
        cost_estimate=pl.CostEstimate(
            flops=int(B * (2 * flops_attn + flops_moe)),
            transcendentals=int(B * (2 * nhead * nq * Lk + nq * E + 2 * nq)),
            bytes_accessed=int(bytes_accessed)),
    )(*args)

    return jnp.transpose(result, (1, 0, 2))       # back to (nq, B, D)


# ---------------------------------------------------------------------------
# Parameter init (PyTorch layout) + one-time kernel-friendly repacking
# ---------------------------------------------------------------------------
def init_params(key, *, hidden_dim, feature_size, moe_nume, dim_feedforward):
    nq = feature_size[0] * feature_size[1]
    D, H, E = hidden_dim, dim_feedforward, moe_nume
    ks = jax.random.split(key, 16)
    s = 0.02

    def nrm(k, shape, scale=s):
        return (scale * jax.random.normal(k, shape)).astype(jnp.float32)

    def attn_params(k):
        k0, k1, k2, k3 = jax.random.split(k, 4)
        return {
            "in_proj_weight": nrm(k0, (3 * D, D)),     # PyTorch (out, in)
            "in_proj_bias": nrm(k1, (3 * D,)),
            "out_proj_weight": nrm(k2, (D, D)),
            "out_proj_bias": nrm(k3, (D,)),
        }

    return {
        "learned_embed": nrm(ks[0], (nq, D), scale=1.0),
        "self_attn": attn_params(ks[1]),
        "multihead_attn": attn_params(ks[2]),
        "norm1_w": jnp.ones((D,), jnp.float32),
        "norm1_b": jnp.zeros((D,), jnp.float32),
        "norm2_w": jnp.ones((D,), jnp.float32),
        "norm2_b": jnp.zeros((D,), jnp.float32),
        "moe": {
            "gate_w": nrm(ks[3], (E, D)),
            "gate_b": nrm(ks[4], (E,)),
            "w1": nrm(ks[5], (E, H, D)),
            "b1": nrm(ks[6], (E, H)),
            "w2": nrm(ks[7], (E, D, H)),
            "b2": nrm(ks[8], (E, D)),
        },
    }


def prepare_params(p, *, nhead):
    """One-time repack: (in,out) weight layout, scale folding, expert stacking."""
    D = p["learned_embed"].shape[1]
    dh = D // nhead
    scale = 1.0 / math.sqrt(dh)

    def attn(a):
        wq, wk, wv = jnp.split(a["in_proj_weight"], 3, axis=0)   # (D, D) each
        bq, bk, bv = jnp.split(a["in_proj_bias"], 3, axis=0)
        return {
            "wq_t": wq.T * scale,                                 # scale folded
            "wkv_t": jnp.concatenate([wk.T, wv.T], axis=1),       # (D, 2D)
            "wo_t": a["out_proj_weight"].T,                       # (D, D)
            "bias4": jnp.stack([bq * scale, bk, bv,
                                a["out_proj_bias"]]),             # (4, D)
        }

    m = p["moe"]
    E, H, _ = m["w1"].shape
    return {
        "learned_embed": p["learned_embed"],
        "self_attn": attn(p["self_attn"]),
        "multihead_attn": attn(p["multihead_attn"]),
        "ln1": jnp.stack([p["norm1_w"], p["norm1_b"]], axis=0),   # (2, D)
        "ln2": jnp.stack([p["norm2_w"], p["norm2_b"]], axis=0),   # (2, D)
        "moe": {
            "gate_w_t": m["gate_w"].T,                            # (D, E)
            "gate_b": m["gate_b"].reshape(1, E),                  # (1, E)
            "gate_expand": jnp.repeat(jnp.eye(E, dtype=jnp.float32),
                                      H, axis=1),                 # (E, E*H)
            "w1_all": jnp.transpose(m["w1"], (2, 0, 1)).reshape(D, E * H),
            "b1_all": m["b1"].reshape(1, E * H),
            "w2_all": jnp.transpose(m["w2"], (0, 2, 1)).reshape(E * H, D),
            "b2": m["b2"],                                        # (E, D)
        },
    }


# ---------------------------------------------------------------------------
# Pure-JAX reference (PyTorch semantics, eval mode) for a numerical self-check
# ---------------------------------------------------------------------------
def _reference_forward(raw, out, memory, *, nhead, moe_topk, eps=1e-5):
    Lk, B, D = memory.shape
    dh = D // nhead
    emb = raw["learned_embed"]
    nq = emb.shape[0]
    tgt = jnp.broadcast_to(emb[None], (B, nq, D))
    mem = jnp.transpose(memory, (1, 0, 2))
    enc = jnp.transpose(out, (1, 0, 2))

    def mha(q, kv, a):
        wq, wk, wv = jnp.split(a["in_proj_weight"], 3, axis=0)
        bq, bk, bv = jnp.split(a["in_proj_bias"], 3, axis=0)
        Q = q @ wq.T + bq
        K = kv @ wk.T + bk
        V = kv @ wv.T + bv
        B_, Lq, _ = Q.shape
        L_ = K.shape[1]
        Q = Q.reshape(B_, Lq, nhead, dh).transpose(0, 2, 1, 3) / math.sqrt(dh)
        K = K.reshape(B_, L_, nhead, dh).transpose(0, 2, 1, 3)
        V = V.reshape(B_, L_, nhead, dh).transpose(0, 2, 1, 3)
        s = jnp.einsum("bhqd,bhkd->bhqk", Q, K)
        p = jax.nn.softmax(s, axis=-1)
        ctx = jnp.einsum("bhqk,bhkd->bhqd", p, V)
        ctx = ctx.transpose(0, 2, 1, 3).reshape(B_, Lq, D)
        return ctx @ a["out_proj_weight"].T + a["out_proj_bias"]

    def ln(x, w, b):
        mu = jnp.mean(x, -1, keepdims=True)
        var = jnp.mean((x - mu) ** 2, -1, keepdims=True)
        return (x - mu) * jax.lax.rsqrt(var + eps) * w + b

    tgt = ln(tgt + mha(tgt, mem, raw["self_attn"]),
             raw["norm1_w"], raw["norm1_b"])
    tgt = ln(tgt + mha(tgt, enc, raw["multihead_attn"]),
             raw["norm2_w"], raw["norm2_b"])

    m = raw["moe"]
    E = m["gate_b"].shape[0]
    x = tgt.reshape(-1, D)
    logits = x @ m["gate_w"].T + m["gate_b"]
    vals, idx = jax.lax.top_k(logits, moe_topk)
    sm = jax.nn.softmax(vals, axis=-1)
    gates = jnp.sum(sm[..., None] * jax.nn.one_hot(idx, E), axis=1)   # (T, E)
    y = jnp.zeros_like(x)
    for e in range(E):
        h = jnp.maximum(x @ m["w1"][e].T + m["b1"][e], 0.0)
        y = y + gates[:, e:e + 1] * (h @ m["w2"][e].T + m["b2"][e])
    tgt = (x + y).reshape(B, nq, D)
    return jnp.transpose(tgt, (1, 0, 2))


# ---------------------------------------------------------------------------
if __name__ == "__main__":
    hidden_dim = 32
    feature_size = (4, 4)          # num_queries = 16
    nhead = 4
    moe_nume = 4
    moe_topk = 2
    dim_feedforward = 64
    batch = 2
    seq = 8                        # memory / out sequence length

    key = jax.random.PRNGKey(0)
    kp, km, ko = jax.random.split(key, 3)

    raw_params = init_params(kp, hidden_dim=hidden_dim,
                             feature_size=feature_size,
                             moe_nume=moe_nume,
                             dim_feedforward=dim_feedforward)
    params = prepare_params(raw_params, nhead=nhead)   # one-time repacking

    memory = jax.random.normal(km, (seq, batch, hidden_dim), dtype=jnp.float32)
    out_in = jax.random.normal(ko, (seq, batch, hidden_dim), dtype=jnp.float32)

    fwd = jax.jit(functools.partial(share_de_layer_forward,
                                    nhead=nhead, moe_topk=moe_topk))
    result = fwd(params, out_in, memory)
    jax.block_until_ready(result)

    expected_shape = (feature_size[0] * feature_size[1], batch, hidden_dim)
    assert result.shape == expected_shape, result.shape
    assert bool(jnp.all(jnp.isfinite(result)))

    # numerical self-check against a pure-JAX reference of the PyTorch module
    ref = _reference_forward(raw_params, out_in, memory,
                             nhead=nhead, moe_topk=moe_topk)
    np.testing.assert_allclose(np.asarray(result), np.asarray(ref),
                               rtol=1e-3, atol=1e-3)
    print("KERNEL_OK")
</pallas_src>

<mosaic_0001>
module attributes {stable_mosaic.version = 11 : i64} {
  func.func @_share_de_layer_kernel(%arg0: i32, %arg1: memref<16x32xf32, #tpu.memory_space<vmem>>, %arg2: memref<1x8x32xf32, #tpu.memory_space<vmem>>, %arg3: memref<1x8x32xf32, #tpu.memory_space<vmem>>, %arg4: memref<32x32xf32, #tpu.memory_space<vmem>>, %arg5: memref<32x64xf32, #tpu.memory_space<vmem>>, %arg6: memref<32x32xf32, #tpu.memory_space<vmem>>, %arg7: memref<4x32xf32, #tpu.memory_space<vmem>>, %arg8: memref<32x32xf32, #tpu.memory_space<vmem>>, %arg9: memref<32x64xf32, #tpu.memory_space<vmem>>, %arg10: memref<32x32xf32, #tpu.memory_space<vmem>>, %arg11: memref<4x32xf32, #tpu.memory_space<vmem>>, %arg12: memref<2x32xf32, #tpu.memory_space<vmem>>, %arg13: memref<2x32xf32, #tpu.memory_space<vmem>>, %arg14: memref<32x4xf32, #tpu.memory_space<vmem>>, %arg15: memref<1x4xf32, #tpu.memory_space<vmem>>, %arg16: memref<4x256xf32, #tpu.memory_space<vmem>>, %arg17: memref<32x256xf32, #tpu.memory_space<vmem>>, %arg18: memref<1x256xf32, #tpu.memory_space<vmem>>, %arg19: memref<256x32xf32, #tpu.memory_space<vmem>>, %arg20: memref<4x32xf32, #tpu.memory_space<vmem>>, %arg21: memref<1x16x32xf32, #tpu.memory_space<vmem>>) attributes {dimension_semantics = [#tpu.dimension_semantics<parallel>], iteration_bounds = array<i64: 2>, scalar_prefetch = 0 : i64, scratch_operands = 0 : i64, tpu.core_type = #tpu.core_type<tc>, window_params = [{pipeline_mode = #tpu.pipeline_mode<synchronous>, transform_indices = @transform_0, window_bounds = array<i64: 16, 32>}, {transform_indices = @transform_1, window_bounds = array<i64: 1, 8, 32>}, {transform_indices = @transform_2, window_bounds = array<i64: 1, 8, 32>}, {pipeline_mode = #tpu.pipeline_mode<synchronous>, transform_indices = @transform_3, window_bounds = array<i64: 32, 32>}, {pipeline_mode = #tpu.pipeline_mode<synchronous>, transform_indices = @transform_4, window_bounds = array<i64: 32, 64>}, {pipeline_mode = #tpu.pipeline_mode<synchronous>, transform_indices = @transform_5, window_bounds = array<i64: 32, 32>}, {pipeline_mode = #tpu.pipeline_mode<synchronous>, transform_indices = @transform_6, window_bounds = array<i64: 4, 32>}, {pipeline_mode = #tpu.pipeline_mode<synchronous>, transform_indices = @transform_7, window_bounds = array<i64: 32, 32>}, {pipeline_mode = #tpu.pipeline_mode<synchronous>, transform_indices = @transform_8, window_bounds = array<i64: 32, 64>}, {pipeline_mode = #tpu.pipeline_mode<synchronous>, transform_indices = @transform_9, window_bounds = array<i64: 32, 32>}, {pipeline_mode = #tpu.pipeline_mode<synchronous>, transform_indices = @transform_10, window_bounds = array<i64: 4, 32>}, {pipeline_mode = #tpu.pipeline_mode<synchronous>, transform_indices = @transform_11, window_bounds = array<i64: 2, 32>}, {pipeline_mode = #tpu.pipeline_mode<synchronous>, transform_indices = @transform_12, window_bounds = array<i64: 2, 32>}, {pipeline_mode = #tpu.pipeline_mode<synchronous>, transform_indices = @transform_13, window_bounds = array<i64: 32, 4>}, {pipeline_mode = #tpu.pipeline_mode<synchronous>, transform_indices = @transform_14, window_bounds = array<i64: 1, 4>}, {pipeline_mode = #tpu.pipeline_mode<synchronous>, transform_indices = @transform_15, window_bounds = array<i64: 4, 256>}, {pipeline_mode = #tpu.pipeline_mode<synchronous>, transform_indices = @transform_16, window_bounds = array<i64: 32, 256>}, {pipeline_mode = #tpu.pipeline_mode<synchronous>, transform_indices = @transform_17, window_bounds = array<i64: 1, 256>}, {pipeline_mode = #tpu.pipeline_mode<synchronous>, transform_indices = @transform_18, window_bounds = array<i64: 256, 32>}, {pipeline_mode = #tpu.pipeline_mode<synchronous>, transform_indices = @transform_19, window_bounds = array<i64: 4, 32>}, {transform_indices = @transform_20, window_bounds = array<i64: 1, 16, 32>}]} {
    %c0 = arith.constant 0 : index
    %c0_0 = arith.constant 0 : index
    %0 = vector.load %arg1[%c0, %c0_0] : memref<16x32xf32, #tpu.memory_space<vmem>>, vector<16x32xf32>
    %c0_1 = arith.constant 0 : index
    %c0_2 = arith.constant 0 : index
    %c0_3 = arith.constant 0 : index
    %1 = vector.load %arg2[%c0_1, %c0_2, %c0_3] : memref<1x8x32xf32, #tpu.memory_space<vmem>>, vector<1x8x32xf32>
    %2 = vector.shape_cast %1 : vector<1x8x32xf32> to vector<8x32xf32>
    %c0_4 = arith.constant 0 : index
    %c0_5 = arith.constant 0 : index
    %c0_6 = arith.constant 0 : index
    %3 = vector.load %arg3[%c0_4, %c0_5, %c0_6] : memref<1x8x32xf32, #tpu.memory_space<vmem>>, vector<1x8x32xf32>
    %4 = vector.shape_cast %3 : vector<1x8x32xf32> to vector<8x32xf32>
    %c0_7 = arith.constant 0 : index
    %c0_8 = arith.constant 0 : index
    %5 = vector.load %arg7[%c0_7, %c0_8] : memref<4x32xf32, #tpu.memory_space<vmem>>, vector<4x32xf32>
    %c0_9 = arith.constant 0 : index
    %c0_10 = arith.constant 0 : index
    %6 = vector.load %arg4[%c0_9, %c0_10] : memref<32x32xf32, #tpu.memory_space<vmem>>, vector<32x32xf32>
    %cst = arith.constant dense<0.000000e+00> : vector<16x32xf32>
    %7 = tpu.matmul %0, %6, %cst {dimension_numbers = #tpu.dot_dimension_numbers<[1], [0], [0], [1], [0, 0, 1, 1], [], []>} : vector<16x32xf32>, vector<32x32xf32>, vector<16x32xf32> -> vector<16x32xf32>
    %8 = vector.extract_strided_slice %5 {offsets = [0, 0], sizes = [1, 32], strides = [1, 1]} : vector<4x32xf32> to vector<1x32xf32>
    %9 = vector.broadcast %8 : vector<1x32xf32> to vector<16x32xf32>
    %10 = arith.addf %7, %9 : vector<16x32xf32>
    %c0_11 = arith.constant 0 : index
    %c0_12 = arith.constant 0 : index
    %11 = vector.load %arg5[%c0_11, %c0_12] : memref<32x64xf32, #tpu.memory_space<vmem>>, vector<32x64xf32>
    %cst_13 = arith.constant dense<0.000000e+00> : vector<8x64xf32>
    %12 = tpu.matmul %2, %11, %cst_13 {dimension_numbers = #tpu.dot_dimension_numbers<[1], [0], [0], [1], [0, 0, 1, 1], [], []>} : vector<8x32xf32>, vector<32x64xf32>, vector<8x64xf32> -> vector<8x64xf32>
    %13 = vector.extract_strided_slice %12 {offsets = [0, 0], sizes = [8, 32], strides = [1, 1]} : vector<8x64xf32> to vector<8x32xf32>
    %14 = vector.extract_strided_slice %5 {offsets = [1, 0], sizes = [1, 32], strides = [1, 1]} : vector<4x32xf32> to vector<1x32xf32>
    %15 = vector.broadcast %14 : vector<1x32xf32> to vector<8x32xf32>
    %16 = arith.addf %13, %15 : vector<8x32xf32>
    %17 = vector.extract_strided_slice %12 {offsets = [0, 32], sizes = [8, 32], strides = [1, 1]} : vector<8x64xf32> to vector<8x32xf32>
    %18 = vector.extract_strided_slice %5 {offsets = [2, 0], sizes = [1, 32], strides = [1, 1]} : vector<4x32xf32> to vector<1x32xf32>
    %19 = vector.broadcast %18 : vector<1x32xf32> to vector<8x32xf32>
    %20 = arith.addf %17, %19 : vector<8x32xf32>
    %21 = vector.extract_strided_slice %10 {offsets = [0, 0], sizes = [16, 8], strides = [1, 1]} : vector<16x32xf32> to vector<16x8xf32>
    %22 = vector.extract_strided_slice %16 {offsets = [0, 0], sizes = [8, 8], strides = [1, 1]} : vector<8x32xf32> to vector<8x8xf32>
    %cst_14 = arith.constant dense<0.000000e+00> : vector<16x8xf32>
    %23 = tpu.matmul %21, %22, %cst_14 {dimension_numbers = #tpu.dot_dimension_numbers<[1], [1], [0], [0], [0, 0, 1, 0], [], []>} : vector<16x8xf32>, vector<8x8xf32>, vector<16x8xf32> -> vector<16x8xf32>
    %24 = vector.extract_strided_slice %10 {offsets = [0, 8], sizes = [16, 8], strides = [1, 1]} : vector<16x32xf32> to vector<16x8xf32>
    %25 = vector.extract_strided_slice %16 {offsets = [0, 8], sizes = [8, 8], strides = [1, 1]} : vector<8x32xf32> to vector<8x8xf32>
    %cst_15 = arith.constant dense<0.000000e+00> : vector<16x8xf32>
    %26 = tpu.matmul %24, %25, %cst_15 {dimension_numbers = #tpu.dot_dimension_numbers<[1], [1], [0], [0], [0, 0, 1, 0], [], []>} : vector<16x8xf32>, vector<8x8xf32>, vector<16x8xf32> -> vector<16x8xf32>
    %27 = vector.extract_strided_slice %10 {offsets = [0, 16], sizes = [16, 8], strides = [1, 1]} : vector<16x32xf32> to vector<16x8xf32>
    %28 = vector.extract_strided_slice %16 {offsets = [0, 16], sizes = [8, 8], strides = [1, 1]} : vector<8x32xf32> to vector<8x8xf32>
    %cst_16 = arith.constant dense<0.000000e+00> : vector<16x8xf32>
    %29 = tpu.matmul %27, %28, %cst_16 {dimension_numbers = #tpu.dot_dimension_numbers<[1], [1], [0], [0], [0, 0, 1, 0], [], []>} : vector<16x8xf32>, vector<8x8xf32>, vector<16x8xf32> -> vector<16x8xf32>
    %30 = vector.extract_strided_slice %10 {offsets = [0, 24], sizes = [16, 8], strides = [1, 1]} : vector<16x32xf32> to vector<16x8xf32>
    %31 = vector.extract_strided_slice %16 {offsets = [0, 24], sizes = [8, 8], strides = [1, 1]} : vector<8x32xf32> to vector<8x8xf32>
    %cst_17 = arith.constant dense<0.000000e+00> : vector<16x8xf32>
    %32 = tpu.matmul %30, %31, %cst_17 {dimension_numbers = #tpu.dot_dimension_numbers<[1], [1], [0], [0], [0, 0, 1, 0], [], []>} : vector<16x8xf32>, vector<8x8xf32>, vector<16x8xf32> -> vector<16x8xf32>
    %33 = tpu.concatenate %23, %26, %29, %32 in 0 : vector<16x8xf32>, vector<16x8xf32>, vector<16x8xf32>, vector<16x8xf32> -> vector<64x8xf32>
    %cst_18 = arith.constant dense<0xFF800000> : vector<64xf32>
    %34 = vector.multi_reduction <maximumf>, %33, %cst_18 [1] : vector<64x8xf32> to vector<64xf32>
    %35 = vector.shape_cast %34 : vector<64xf32> to vector<64x1xf32>
    %36 = vector.broadcast %35 : vector<64x1xf32> to vector<64x8xf32>
    %37 = arith.subf %33, %36 : vector<64x8xf32>
    %38 = math.exp %37 : vector<64x8xf32>
    %cst_19 = arith.constant dense<0.000000e+00> : vector<64xf32>
    %39 = vector.multi_reduction <add>, %38, %cst_19 [1] : vector<64x8xf32> to vector<64xf32>
    %40 = vector.shape_cast %39 : vector<64xf32> to vector<64x1xf32>
    %41 = vector.broadcast %40 : vector<64x1xf32> to vector<64x8xf32>
    %42 = arith.divf %38, %41 : vector<64x8xf32>
    %43 = vector.extract_strided_slice %42 {offsets = [0, 0], sizes = [16, 8], strides = [1, 1]} : vector<64x8xf32> to vector<16x8xf32>
    %44 = vector.extract_strided_slice %20 {offsets = [0, 0], sizes = [8, 8], strides = [1, 1]} : vector<8x32xf32> to vector<8x8xf32>
    %cst_20 = arith.constant dense<0.000000e+00> : vector<16x8xf32>
    %45 = tpu.matmul %43, %44, %cst_20 {dimension_numbers = #tpu.dot_dimension_numbers<[1], [0], [0], [1], [0, 0, 1, 1], [], []>} : vector<16x8xf32>, vector<8x8xf32>, vector<16x8xf32> -> vector<16x8xf32>
    %46 = vector.extract_strided_slice %42 {offsets = [16, 0], sizes = [16, 8], strides = [1, 1]} : vector<64x8xf32> to vector<16x8xf32>
    %47 = vector.extract_strided_slice %20 {offsets = [0, 8], sizes = [8, 8], strides = [1, 1]} : vector<8x32xf32> to vector<8x8xf32>
    %cst_21 = arith.constant dense<0.000000e+00> : vector<16x8xf32>
    %48 = tpu.matmul %46, %47, %cst_21 {dimension_numbers = #tpu.dot_dimension_numbers<[1], [0], [0], [1], [0, 0, 1, 1], [], []>} : vector<16x8xf32>, vector<8x8xf32>, vector<16x8xf32> -> vector<16x8xf32>
    %49 = vector.extract_strided_slice %42 {offsets = [32, 0], sizes = [16, 8], strides = [1, 1]} : vector<64x8xf32> to vector<16x8xf32>
    %50 = vector.extract_strided_slice %20 {offsets = [0, 16], sizes = [8, 8], strides = [1, 1]} : vector<8x32xf32> to vector<8x8xf32>
    %cst_22 = arith.constant dense<0.000000e+00> : vector<16x8xf32>
    %51 = tpu.matmul %49, %50, %cst_22 {dimension_numbers = #tpu.dot_dimension_numbers<[1], [0], [0], [1], [0, 0, 1, 1], [], []>} : vector<16x8xf32>, vector<8x8xf32>, vector<16x8xf32> -> vector<16x8xf32>
    %52 = vector.extract_strided_slice %42 {offsets = [48, 0], sizes = [16, 8], strides = [1, 1]} : vector<64x8xf32> to vector<16x8xf32>
    %53 = vector.extract_strided_slice %20 {offsets = [0, 24], sizes = [8, 8], strides = [1, 1]} : vector<8x32xf32> to vector<8x8xf32>
    %cst_23 = arith.constant dense<0.000000e+00> : vector<16x8xf32>
    %54 = tpu.matmul %52, %53, %cst_23 {dimension_numbers = #tpu.dot_dimension_numbers<[1], [0], [0], [1], [0, 0, 1, 1], [], []>} : vector<16x8xf32>, vector<8x8xf32>, vector<16x8xf32> -> vector<16x8xf32>
    %55 = tpu.concatenate %45, %48, %51, %54 in 1 : vector<16x8xf32>, vector<16x8xf32>, vector<16x8xf32>, vector<16x8xf32> -> vector<16x32xf32>
    %c0_24 = arith.constant 0 : index
    %c0_25 = arith.constant 0 : index
    %56 = vector.load %arg6[%c0_24, %c0_25] : memref<32x32xf32, #tpu.memory_space<vmem>>, vector<32x32xf32>
    %cst_26 = arith.constant dense<0.000000e+00> : vector<16x32xf32>
    %57 = tpu.matmul %55, %56, %cst_26 {dimension_numbers = #tpu.dot_dimension_numbers<[1], [0], [0], [1], [0, 0, 1, 1], [], []>} : vector<16x32xf32>, vector<32x32xf32>, vector<16x32xf32> -> vector<16x32xf32>
    %58 = vector.extract_strided_slice %5 {offsets = [3, 0], sizes = [1, 32], strides = [1, 1]} : vector<4x32xf32> to vector<1x32xf32>
    %59 = vector.broadcast %58 : vector<1x32xf32> to vector<16x32xf32>
    %60 = arith.addf %57, %59 : vector<16x32xf32>
    %61 = arith.addf %0, %60 : vector<16x32xf32>
    %c0_27 = arith.constant 0 : index
    %c0_28 = arith.constant 0 : index
    %62 = vector.load %arg12[%c0_27, %c0_28] : memref<2x32xf32, #tpu.memory_space<vmem>>, vector<2x32xf32>
    %cst_29 = arith.constant dense<0.000000e+00> : vector<16xf32>
    %63 = vector.multi_reduction <add>, %61, %cst_29 [1] : vector<16x32xf32> to vector<16xf32>
    %64 = vector.shape_cast %63 : vector<16xf32> to vector<16x1xf32>
    %cst_30 = arith.constant 3.200000e+01 : f32
    %65 = vector.broadcast %cst_30 : f32 to vector<16x1xf32>
    %66 = arith.divf %64, %65 : vector<16x1xf32>
    %67 = vector.broadcast %66 : vector<16x1xf32> to vector<16x32xf32>
    %68 = arith.subf %61, %67 : vector<16x32xf32>
    %69 = arith.mulf %68, %68 : vector<16x32xf32>
    %cst_31 = arith.constant dense<0.000000e+00> : vector<16xf32>
    %70 = vector.multi_reduction <add>, %69, %cst_31 [1] : vector<16x32xf32> to vector<16xf32>
    %71 = vector.shape_cast %70 : vector<16xf32> to vector<16x1xf32>
    %cst_32 = arith.constant 3.200000e+01 : f32
    %72 = vector.broadcast %cst_32 : f32 to vector<16x1xf32>
    %73 = arith.divf %71, %72 : vector<16x1xf32>
    %cst_33 = arith.constant 9.99999974E-6 : f32
    %74 = vector.broadcast %cst_33 : f32 to vector<16x1xf32>
    %75 = arith.addf %73, %74 : vector<16x1xf32>
    %76 = math.rsqrt %75 : vector<16x1xf32>
    %77 = vector.broadcast %76 : vector<16x1xf32> to vector<16x32xf32>
    %78 = arith.mulf %68, %77 : vector<16x32xf32>
    %79 = vector.extract_strided_slice %62 {offsets = [0, 0], sizes = [1, 32], strides = [1, 1]} : vector<2x32xf32> to vector<1x32xf32>
    %80 = vector.broadcast %79 : vector<1x32xf32> to vector<16x32xf32>
    %81 = arith.mulf %78, %80 : vector<16x32xf32>
    %82 = vector.extract_strided_slice %62 {offsets = [1, 0], sizes = [1, 32], strides = [1, 1]} : vector<2x32xf32> to vector<1x32xf32>
    %83 = vector.broadcast %82 : vector<1x32xf32> to vector<16x32xf32>
    %84 = arith.addf %81, %83 : vector<16x32xf32>
    %c0_34 = arith.constant 0 : index
    %c0_35 = arith.constant 0 : index
    %85 = vector.load %arg11[%c0_34, %c0_35] : memref<4x32xf32, #tpu.memory_space<vmem>>, vector<4x32xf32>
    %c0_36 = arith.constant 0 : index
    %c0_37 = arith.constant 0 : index
    %86 = vector.load %arg8[%c0_36, %c0_37] : memref<32x32xf32, #tpu.memory_space<vmem>>, vector<32x32xf32>
    %cst_38 = arith.constant dense<0.000000e+00> : vector<16x32xf32>
    %87 = tpu.matmul %84, %86, %cst_38 {dimension_numbers = #tpu.dot_dimension_numbers<[1], [0], [0], [1], [0, 0, 1, 1], [], []>} : vector<16x32xf32>, vector<32x32xf32>, vector<16x32xf32> -> vector<16x32xf32>
    %88 = vector.extract_strided_slice %85 {offsets = [0, 0], sizes = [1, 32], strides = [1, 1]} : vector<4x32xf32> to vector<1x32xf32>
    %89 = vector.broadcast %88 : vector<1x32xf32> to vector<16x32xf32>
    %90 = arith.addf %87, %89 : vector<16x32xf32>
    %c0_39 = arith.constant 0 : index
    %c0_40 = arith.constant 0 : index
    %91 = vector.load %arg9[%c0_39, %c0_40] : memref<32x64xf32, #tpu.memory_space<vmem>>, vector<32x64xf32>
    %cst_41 = arith.constant dense<0.000000e+00> : vector<8x64xf32>
    %92 = tpu.matmul %4, %91, %cst_41 {dimension_numbers = #tpu.dot_dimension_numbers<[1], [0], [0], [1], [0, 0, 1, 1], [], []>} : vector<8x32xf32>, vector<32x64xf32>, vector<8x64xf32> -> vector<8x64xf32>
    %93 = vector.extract_strided_slice %92 {offsets = [0, 0], sizes = [8, 32], strides = [1, 1]} : vector<8x64xf32> to vector<8x32xf32>
    %94 = vector.extract_strided_slice %85 {offsets = [1, 0], sizes = [1, 32], strides = [1, 1]} : vector<4x32xf32> to vector<1x32xf32>
    %95 = vector.broadcast %94 : vector<1x32xf32> to vector<8x32xf32>
    %96 = arith.addf %93, %95 : vector<8x32xf32>
    %97 = vector.extract_strided_slice %92 {offsets = [0, 32], sizes = [8, 32], strides = [1, 1]} : vector<8x64xf32> to vector<8x32xf32>
    %98 = vector.extract_strided_slice %85 {offsets = [2, 0], sizes = [1, 32], strides = [1, 1]} : vector<4x32xf32> to vector<1x32xf32>
    %99 = vector.broadcast %98 : vector<1x32xf32> to vector<8x32xf32>
    %100 = arith.addf %97, %99 : vector<8x32xf32>
    %101 = vector.extract_strided_slice %90 {offsets = [0, 0], sizes = [16, 8], strides = [1, 1]} : vector<16x32xf32> to vector<16x8xf32>
    %102 = vector.extract_strided_slice %96 {offsets = [0, 0], sizes = [8, 8], strides = [1, 1]} : vector<8x32xf32> to vector<8x8xf32>
    %cst_42 = arith.constant dense<0.000000e+00> : vector<16x8xf32>
    %103 = tpu.matmul %101, %102, %cst_42 {dimension_numbers = #tpu.dot_dimension_numbers<[1], [1], [0], [0], [0, 0, 1, 0], [], []>} : vector<16x8xf32>, vector<8x8xf32>, vector<16x8xf32> -> vector<16x8xf32>
    %104 = vector.extract_strided_slice %90 {offsets = [0, 8], sizes = [16, 8], strides = [1, 1]} : vector<16x32xf32> to vector<16x8xf32>
    %105 = vector.extract_strided_slice %96 {offsets = [0, 8], sizes = [8, 8], strides = [1, 1]} : vector<8x32xf32> to vector<8x8xf32>
    %cst_43 = arith.constant dense<0.000000e+00> : vector<16x8xf32>
    %106 = tpu.matmul %104, %105, %cst_43 {dimension_numbers = #tpu.dot_dimension_numbers<[1], [1], [0], [0], [0, 0, 1, 0], [], []>} : vector<16x8xf32>, vector<8x8xf32>, vector<16x8xf32> -> vector<16x8xf32>
    %107 = vector.extract_strided_slice %90 {offsets = [0, 16], sizes = [16, 8], strides = [1, 1]} : vector<16x32xf32> to vector<16x8xf32>
    %108 = vector.extract_strided_slice %96 {offsets = [0, 16], sizes = [8, 8], strides = [1, 1]} : vector<8x32xf32> to vector<8x8xf32>
    %cst_44 = arith.constant dense<0.000000e+00> : vector<16x8xf32>
    %109 = tpu.matmul %107, %108, %cst_44 {dimension_numbers = #tpu.dot_dimension_numbers<[1], [1], [0], [0], [0, 0, 1, 0], [], []>} : vector<16x8xf32>, vector<8x8xf32>, vector<16x8xf32> -> vector<16x8xf32>
    %110 = vector.extract_strided_slice %90 {offsets = [0, 24], sizes = [16, 8], strides = [1, 1]} : vector<16x32xf32> to vector<16x8xf32>
    %111 = vector.extract_strided_slice %96 {offsets = [0, 24], sizes = [8, 8], strides = [1, 1]} : vector<8x32xf32> to vector<8x8xf32>
    %cst_45 = arith.constant dense<0.000000e+00> : vector<16x8xf32>
    %112 = tpu.matmul %110, %111, %cst_45 {dimension_numbers = #tpu.dot_dimension_numbers<[1], [1], [0], [0], [0, 0, 1, 0], [], []>} : vector<16x8xf32>, vector<8x8xf32>, vector<16x8xf32> -> vector<16x8xf32>
    %113 = tpu.concatenate %103, %106, %109, %112 in 0 : vector<16x8xf32>, vector<16x8xf32>, vector<16x8xf32>, vector<16x8xf32> -> vector<64x8xf32>
    %cst_46 = arith.constant dense<0xFF800000> : vector<64xf32>
    %114 = vector.multi_reduction <maximumf>, %113, %cst_46 [1] : vector<64x8xf32> to vector<64xf32>
    %115 = vector.shape_cast %114 : vector<64xf32> to vector<64x1xf32>
    %116 = vector.broadcast %115 : vector<64x1xf32> to vector<64x8xf32>
    %117 = arith.subf %113, %116 : vector<64x8xf32>
    %118 = math.exp %117 : vector<64x8xf32>
    %cst_47 = arith.constant dense<0.000000e+00> : vector<64xf32>
    %119 = vector.multi_reduction <add>, %118, %cst_47 [1] : vector<64x8xf32> to vector<64xf32>
    %120 = vector.shape_cast %119 : vector<64xf32> to vector<64x1xf32>
    %121 = vector.broadcast %120 : vector<64x1xf32> to vector<64x8xf32>
    %122 = arith.divf %118, %121 : vector<64x8xf32>
    %123 = vector.extract_strided_slice %122 {offsets = [0, 0], sizes = [16, 8], strides = [1, 1]} : vector<64x8xf32> to vector<16x8xf32>
    %124 = vector.extract_strided_slice %100 {offsets = [0, 0], sizes = [8, 8], strides = [1, 1]} : vector<8x32xf32> to vector<8x8xf32>
    %cst_48 = arith.constant dense<0.000000e+00> : vector<16x8xf32>
    %125 = tpu.matmul %123, %124, %cst_48 {dimension_numbers = #tpu.dot_dimension_numbers<[1], [0], [0], [1], [0, 0, 1, 1], [], []>} : vector<16x8xf32>, vector<8x8xf32>, vector<16x8xf32> -> vector<16x8xf32>
    %126 = vector.extract_strided_slice %122 {offsets = [16, 0], sizes = [16, 8], strides = [1, 1]} : vector<64x8xf32> to vector<16x8xf32>
    %127 = vector.extract_strided_slice %100 {offsets = [0, 8], sizes = [8, 8], strides = [1, 1]} : vector<8x32xf32> to vector<8x8xf32>
    %cst_49 = arith.constant dense<0.000000e+00> : vector<16x8xf32>
    %128 = tpu.matmul %126, %127, %cst_49 {dimension_numbers = #tpu.dot_dimension_numbers<[1], [0], [0], [1], [0, 0, 1, 1], [], []>} : vector<16x8xf32>, vector<8x8xf32>, vector<16x8xf32> -> vector<16x8xf32>
    %129 = vector.extract_strided_slice %122 {offsets = [32, 0], sizes = [16, 8], strides = [1, 1]} : vector<64x8xf32> to vector<16x8xf32>
    %130 = vector.extract_strided_slice %100 {offsets = [0, 16], sizes = [8, 8], strides = [1, 1]} : vector<8x32xf32> to vector<8x8xf32>
    %cst_50 = arith.constant dense<0.000000e+00> : vector<16x8xf32>
    %131 = tpu.matmul %129, %130, %cst_50 {dimension_numbers = #tpu.dot_dimension_numbers<[1], [0], [0], [1], [0, 0, 1, 1], [], []>} : vector<16x8xf32>, vector<8x8xf32>, vector<16x8xf32> -> vector<16x8xf32>
    %132 = vector.extract_strided_slice %122 {offsets = [48, 0], sizes = [16, 8], strides = [1, 1]} : vector<64x8xf32> to vector<16x8xf32>
    %133 = vector.extract_strided_slice %100 {offsets = [0, 24], sizes = [8, 8], strides = [1, 1]} : vector<8x32xf32> to vector<8x8xf32>
    %cst_51 = arith.constant dense<0.000000e+00> : vector<16x8xf32>
    %134 = tpu.matmul %132, %133, %cst_51 {dimension_numbers = #tpu.dot_dimension_numbers<[1], [0], [0], [1], [0, 0, 1, 1], [], []>} : vector<16x8xf32>, vector<8x8xf32>, vector<16x8xf32> -> vector<16x8xf32>
    %135 = tpu.concatenate %125, %128, %131, %134 in 1 : vector<16x8xf32>, vector<16x8xf32>, vector<16x8xf32>, vector<16x8xf32> -> vector<16x32xf32>
    %c0_52 = arith.constant 0 : index
    %c0_53 = arith.constant 0 : index
    %136 = vector.load %arg10[%c0_52, %c0_53] : memref<32x32xf32, #tpu.memory_space<vmem>>, vector<32x32xf32>
    %cst_54 = arith.constant dense<0.000000e+00> : vector<16x32xf32>
    %137 = tpu.matmul %135, %136, %cst_54 {dimension_numbers = #tpu.dot_dimension_numbers<[1], [0], [0], [1], [0, 0, 1, 1], [], []>} : vector<16x32xf32>, vector<32x32xf32>, vector<16x32xf32> -> vector<16x32xf32>
    %138 = vector.extract_strided_slice %85 {offsets = [3, 0], sizes = [1, 32], strides = [1, 1]} : vector<4x32xf32> to vector<1x32xf32>
    %139 = vector.broadcast %138 : vector<1x32xf32> to vector<16x32xf32>
    %140 = arith.addf %137, %139 : vector<16x32xf32>
    %141 = arith.addf %84, %140 : vector<16x32xf32>
    %c0_55 = arith.constant 0 : index
    %c0_56 = arith.constant 0 : index
    %142 = vector.load %arg13[%c0_55, %c0_56] : memref<2x32xf32, #tpu.memory_space<vmem>>, vector<2x32xf32>
    %cst_57 = arith.constant dense<0.000000e+00> : vector<16xf32>
    %143 = vector.multi_reduction <add>, %141, %cst_57 [1] : vector<16x32xf32> to vector<16xf32>
    %144 = vector.shape_cast %143 : vector<16xf32> to vector<16x1xf32>
    %cst_58 = arith.constant 3.200000e+01 : f32
    %145 = vector.broadcast %cst_58 : f32 to vector<16x1xf32>
    %146 = arith.divf %144, %145 : vector<16x1xf32>
    %147 = vector.broadcast %146 : vector<16x1xf32> to vector<16x32xf32>
    %148 = arith.subf %141, %147 : vector<16x32xf32>
    %149 = arith.mulf %148, %148 : vector<16x32xf32>
    %cst_59 = arith.constant dense<0.000000e+00> : vector<16xf32>
    %150 = vector.multi_reduction <add>, %149, %cst_59 [1] : vector<16x32xf32> to vector<16xf32>
    %151 = vector.shape_cast %150 : vector<16xf32> to vector<16x1xf32>
    %cst_60 = arith.constant 3.200000e+01 : f32
    %152 = vector.broadcast %cst_60 : f32 to vector<16x1xf32>
    %153 = arith.divf %151, %152 : vector<16x1xf32>
    %cst_61 = arith.constant 9.99999974E-6 : f32
    %154 = vector.broadcast %cst_61 : f32 to vector<16x1xf32>
    %155 = arith.addf %153, %154 : vector<16x1xf32>
    %156 = math.rsqrt %155 : vector<16x1xf32>
    %157 = vector.broadcast %156 : vector<16x1xf32> to vector<16x32xf32>
    %158 = arith.mulf %148, %157 : vector<16x32xf32>
    %159 = vector.extract_strided_slice %142 {offsets = [0, 0], sizes = [1, 32], strides = [1, 1]} : vector<2x32xf32> to vector<1x32xf32>
    %160 = vector.broadcast %159 : vector<1x32xf32> to vector<16x32xf32>
    %161 = arith.mulf %158, %160 : vector<16x32xf32>
    %162 = vector.extract_strided_slice %142 {offsets = [1, 0], sizes = [1, 32], strides = [1, 1]} : vector<2x32xf32> to vector<1x32xf32>
    %163 = vector.broadcast %162 : vector<1x32xf32> to vector<16x32xf32>
    %164 = arith.addf %161, %163 : vector<16x32xf32>
    %c0_62 = arith.constant 0 : index
    %c0_63 = arith.constant 0 : index
    %165 = vector.load %arg14[%c0_62, %c0_63] : memref<32x4xf32, #tpu.memory_space<vmem>>, vector<32x4xf32>
    %cst_64 = arith.constant dense<0.000000e+00> : vector<16x4xf32>
    %166 = tpu.matmul %164, %165, %cst_64 {dimension_numbers = #tpu.dot_dimension_numbers<[1], [0], [0], [1], [0, 0, 1, 1], [], []>} : vector<16x32xf32>, vector<32x4xf32>, vector<16x4xf32> -> vector<16x4xf32>
    %c0_65 = arith.constant 0 : index
    %c0_66 = arith.constant 0 : index
    %167 = vector.load %arg15[%c0_65, %c0_66] : memref<1x4xf32, #tpu.memory_space<vmem>>, vector<1x4xf32>
    %168 = vector.broadcast %167 : vector<1x4xf32> to vector<16x4xf32>
    %169 = arith.addf %166, %168 : vector<16x4xf32>
    %cst_67 = arith.constant dense<0xFF800000> : vector<16xf32>
    %170 = vector.multi_reduction <maximumf>, %169, %cst_67 [1] : vector<16x4xf32> to vector<16xf32>
    %171 = vector.shape_cast %170 : vector<16xf32> to vector<16x1xf32>
    %172 = vector.broadcast %171 : vector<16x1xf32> to vector<16x4xf32>
    %173 = arith.cmpf oge, %169, %172 : vector<16x4xf32>
    %cst_68 = arith.constant -1.000000e+30 : f32
    %174 = vector.broadcast %cst_68 : f32 to vector<16x4xf32>
    %175 = arith.select %173, %174, %169 : vector<16x4xi1>, vector<16x4xf32>
    %cst_69 = arith.constant dense<0xFF800000> : vector<16xf32>
    %176 = vector.multi_reduction <maximumf>, %175, %cst_69 [1] : vector<16x4xf32> to vector<16xf32>
    %177 = vector.shape_cast %176 : vector<16xf32> to vector<16x1xf32>
    %178 = vector.broadcast %177 : vector<16x1xf32> to vector<16x4xf32>
    %179 = arith.cmpf oge, %169, %178 : vector<16x4xf32>
    %cst_70 = arith.constant -1.000000e+30 : f32
    %180 = vector.broadcast %cst_70 : f32 to vector<16x4xf32>
    %181 = arith.select %179, %169, %180 : vector<16x4xi1>, vector<16x4xf32>
    %cst_71 = arith.constant dense<0xFF800000> : vector<16xf32>
    %182 = vector.multi_reduction <maximumf>, %181, %cst_71 [1] : vector<16x4xf32> to vector<16xf32>
    %183 = vector.shape_cast %182 : vector<16xf32> to vector<16x1xf32>
    %184 = vector.broadcast %183 : vector<16x1xf32> to vector<16x4xf32>
    %185 = arith.subf %181, %184 : vector<16x4xf32>
    %186 = math.exp %185 : vector<16x4xf32>
    %cst_72 = arith.constant 0.000000e+00 : f32
    %187 = vector.broadcast %cst_72 : f32 to vector<16x4xf32>
    %188 = arith.select %179, %186, %187 : vector<16x4xi1>, vector<16x4xf32>
    %cst_73 = arith.constant dense<0.000000e+00> : vector<16xf32>
    %189 = vector.multi_reduction <add>, %188, %cst_73 [1] : vector<16x4xf32> to vector<16xf32>
    %190 = vector.shape_cast %189 : vector<16xf32> to vector<16x1xf32>
    %191 = vector.broadcast %190 : vector<16x1xf32> to vector<16x4xf32>
    %192 = arith.divf %188, %191 : vector<16x4xf32>
    %c0_74 = arith.constant 0 : index
    %c0_75 = arith.constant 0 : index
    %193 = vector.load %arg17[%c0_74, %c0_75] : memref<32x256xf32, #tpu.memory_space<vmem>>, vector<32x256xf32>
    %cst_76 = arith.constant dense<0.000000e+00> : vector<16x256xf32>
    %194 = tpu.matmul %164, %193, %cst_76 {dimension_numbers = #tpu.dot_dimension_numbers<[1], [0], [0], [1], [0, 0, 1, 1], [], []>} : vector<16x32xf32>, vector<32x256xf32>, vector<16x256xf32> -> vector<16x256xf32>
    %c0_77 = arith.constant 0 : index
    %c0_78 = arith.constant 0 : index
    %195 = vector.load %arg18[%c0_77, %c0_78] : memref<1x256xf32, #tpu.memory_space<vmem>>, vector<1x256xf32>
    %196 = vector.broadcast %195 : vector<1x256xf32> to vector<16x256xf32>
    %197 = arith.addf %194, %196 : vector<16x256xf32>
    %cst_79 = arith.constant 0.000000e+00 : f32
    %198 = vector.broadcast %cst_79 : f32 to vector<16x256xf32>
    %199 = arith.maximumf %197, %198 : vector<16x256xf32>
    %c0_80 = arith.constant 0 : index
    %c0_81 = arith.constant 0 : index
    %200 = vector.load %arg16[%c0_80, %c0_81] : memref<4x256xf32, #tpu.memory_space<vmem>>, vector<4x256xf32>
    %cst_82 = arith.constant dense<0.000000e+00> : vector<16x256xf32>
    %201 = tpu.matmul %192, %200, %cst_82 {dimension_numbers = #tpu.dot_dimension_numbers<[1], [0], [0], [1], [0, 0, 1, 1], [], []>} : vector<16x4xf32>, vector<4x256xf32>, vector<16x256xf32> -> vector<16x256xf32>
    %202 = arith.mulf %199, %201 : vector<16x256xf32>
    %c0_83 = arith.constant 0 : index
    %c0_84 = arith.constant 0 : index
    %203 = vector.load %arg19[%c0_83, %c0_84] : memref<256x32xf32, #tpu.memory_space<vmem>>, vector<256x32xf32>
    %cst_85 = arith.constant dense<0.000000e+00> : vector<16x32xf32>
    %204 = tpu.matmul %202, %203, %cst_85 {dimension_numbers = #tpu.dot_dimension_numbers<[1], [0], [0], [1], [0, 0, 1, 1], [], []>} : vector<16x256xf32>, vector<256x32xf32>, vector<16x32xf32> -> vector<16x32xf32>
    %c0_86 = arith.constant 0 : index
    %c0_87 = arith.constant 0 : index
    %205 = vector.load %arg20[%c0_86, %c0_87] : memref<4x32xf32, #tpu.memory_space<vmem>>, vector<4x32xf32>
    %cst_88 = arith.constant dense<0.000000e+00> : vector<16x32xf32>
    %206 = tpu.matmul %192, %205, %cst_88 {dimension_numbers = #tpu.dot_dimension_numbers<[1], [0], [0], [1], [0, 0, 1, 1], [], []>} : vector<16x4xf32>, vector<4x32xf32>, vector<16x32xf32> -> vector<16x32xf32>
    %207 = arith.addf %204, %206 : vector<16x32xf32>
    %208 = arith.addf %164, %207 : vector<16x32xf32>
    %c0_89 = arith.constant 0 : index
    %c0_90 = arith.constant 0 : index
    %c0_91 = arith.constant 0 : index
    %209 = vector.load %arg21[%c0_89, %c0_90, %c0_91] : memref<1x16x32xf32, #tpu.memory_space<vmem>>, vector<1x16x32xf32>
    %210 = vector.shape_cast %209 : vector<1x16x32xf32> to vector<16x32xf32>
    %211 = vector.shape_cast %208 : vector<16x32xf32> to vector<1x16x32xf32>
    tpu.vector_store %arg21[%c0_89, %c0_90, %c0_91], %211 {strides = array<i32>} : memref<1x16x32xf32, #tpu.memory_space<vmem>>, vector<1x16x32xf32>,
    return
  }
  func.func @transform_0(%arg0: i32) -> (i32, i32) {
    %c0_i32 = arith.constant 0 : i32
    %c0_i32_0 = arith.constant 0 : i32
    %c0_i32_1 = arith.constant 0 : i32
    return %c0_i32, %c0_i32_0 : i32, i32
  }
  func.func @transform_1(%arg0: i32) -> (i32, i32, i32) {
    %c0_i32 = arith.constant 0 : i32
    %c0_i32_0 = arith.constant 0 : i32
    %c0_i32_1 = arith.constant 0 : i32
    return %arg0, %c0_i32, %c0_i32_0 : i32, i32, i32
  }
  func.func @transform_2(%arg0: i32) -> (i32, i32, i32) {
    %c0_i32 = arith.constant 0 : i32
    %c0_i32_0 = arith.constant 0 : i32
    %c0_i32_1 = arith.constant 0 : i32
    return %arg0, %c0_i32, %c0_i32_0 : i32, i32, i32
  }
  func.func @transform_3(%arg0: i32) -> (i32, i32) {
    %c0_i32 = arith.constant 0 : i32
    %c0_i32_0 = arith.constant 0 : i32
    %c0_i32_1 = arith.constant 0 : i32
    return %c0_i32, %c0_i32_0 : i32, i32
  }
  func.func @transform_4(%arg0: i32) -> (i32, i32) {
    %c0_i32 = arith.constant 0 : i32
    %c0_i32_0 = arith.constant 0 : i32
    %c0_i32_1 = arith.constant 0 : i32
    return %c0_i32, %c0_i32_0 : i32, i32
  }
  func.func @transform_5(%arg0: i32) -> (i32, i32) {
    %c0_i32 = arith.constant 0 : i32
    %c0_i32_0 = arith.constant 0 : i32
    %c0_i32_1 = arith.constant 0 : i32
    return %c0_i32, %c0_i32_0 : i32, i32
  }
  func.func @transform_6(%arg0: i32) -> (i32, i32) {
    %c0_i32 = arith.constant 0 : i32
    %c0_i32_0 = arith.constant 0 : i32
    %c0_i32_1 = arith.constant 0 : i32
    return %c0_i32, %c0_i32_0 : i32, i32
  }
  func.func @transform_7(%arg0: i32) -> (i32, i32) {
    %c0_i32 = arith.constant 0 : i32
    %c0_i32_0 = arith.constant 0 : i32
    %c0_i32_1 = arith.constant 0 : i32
    return %c0_i32, %c0_i32_0 : i32, i32
  }
  func.func @transform_8(%arg0: i32) -> (i32, i32) {
    %c0_i32 = arith.constant 0 : i32
    %c0_i32_0 = arith.constant 0 : i32
    %c0_i32_1 = arith.constant 0 : i32
    return %c0_i32, %c0_i32_0 : i32, i32
  }
  func.func @transform_9(%arg0: i32) -> (i32, i32) {
    %c0_i32 = arith.constant 0 : i32
    %c0_i32_0 = arith.constant 0 : i32
    %c0_i32_1 = arith.constant 0 : i32
    return %c0_i32, %c0_i32_0 : i32, i32
  }
  func.func @transform_10(%arg0: i32) -> (i32, i32) {
    %c0_i32 = arith.constant 0 : i32
    %c0_i32_0 = arith.constant 0 : i32
    %c0_i32_1 = arith.constant 0 : i32
    return %c0_i32, %c0_i32_0 : i32, i32
  }
  func.func @transform_11(%arg0: i32) -> (i32, i32) {
    %c0_i32 = arith.constant 0 : i32
    %c0_i32_0 = arith.constant 0 : i32
    %c0_i32_1 = arith.constant 0 : i32
    return %c0_i32, %c0_i32_0 : i32, i32
  }
  func.func @transform_12(%arg0: i32) -> (i32, i32) {
    %c0_i32 = arith.constant 0 : i32
    %c0_i32_0 = arith.constant 0 : i32
    %c0_i32_1 = arith.constant 0 : i32
    return %c0_i32, %c0_i32_0 : i32, i32
  }
  func.func @transform_13(%arg0: i32) -> (i32, i32) {
    %c0_i32 = arith.constant 0 : i32
    %c0_i32_0 = arith.constant 0 : i32
    %c0_i32_1 = arith.constant 0 : i32
    return %c0_i32, %c0_i32_0 : i32, i32
  }
  func.func @transform_14(%arg0: i32) -> (i32, i32) {
    %c0_i32 = arith.constant 0 : i32
    %c0_i32_0 = arith.constant 0 : i32
    %c0_i32_1 = arith.constant 0 : i32
    return %c0_i32, %c0_i32_0 : i32, i32
  }
  func.func @transform_15(%arg0: i32) -> (i32, i32) {
    %c0_i32 = arith.constant 0 : i32
    %c0_i32_0 = arith.constant 0 : i32
    %c0_i32_1 = arith.constant 0 : i32
    return %c0_i32, %c0_i32_0 : i32, i32
  }
  func.func @transform_16(%arg0: i32) -> (i32, i32) {
    %c0_i32 = arith.constant 0 : i32
    %c0_i32_0 = arith.constant 0 : i32
    %c0_i32_1 = arith.constant 0 : i32
    return %c0_i32, %c0_i32_0 : i32, i32
  }
  func.func @transform_17(%arg0: i32) -> (i32, i32) {
    %c0_i32 = arith.constant 0 : i32
    %c0_i32_0 = arith.constant 0 : i32
    %c0_i32_1 = arith.constant 0 : i32
    return %c0_i32, %c0_i32_0 : i32, i32
  }
  func.func @transform_18(%arg0: i32) -> (i32, i32) {
    %c0_i32 = arith.constant 0 : i32
    %c0_i32_0 = arith.constant 0 : i32
    %c0_i32_1 = arith.constant 0 : i32
    return %c0_i32, %c0_i32_0 : i32, i32
  }
  func.func @transform_19(%arg0: i32) -> (i32, i32) {
    %c0_i32 = arith.constant 0 : i32
    %c0_i32_0 = arith.constant 0 : i32
    %c0_i32_1 = arith.constant 0 : i32
    return %c0_i32, %c0_i32_0 : i32, i32
  }
  func.func @transform_20(%arg0: i32) -> (i32, i32, i32) {
    %c0_i32 = arith.constant 0 : i32
    %c0_i32_0 = arith.constant 0 : i32
    %c0_i32_1 = arith.constant 0 : i32
    return %arg0, %c0_i32, %c0_i32_0 : i32, i32, i32
  }
}

</mosaic_0001>

<llo_original>
// kernel: share_de_layer_forward.1
$region0: #{share_de_layer_forward.1}
  #allocation0 [shape = 'u32[]', space=smem, size = 0x4, offset = 0x4, fixed_abs, tag = 'smem constant byte address 0x4 - core index']
  #allocation1 [shape = 'u32[72,128]{1,0:T(1,128)}', space=vmem, size = 0x9000, scoped, tag = 'internal scratch']
  %s0 = inlined_call_operand.vmem [shape: f32[16,32], index: 0, kind: input, shape index: {}]
  %s1 = inlined_call_operand.vmem [shape: f32[2,8,32], index: 1, kind: input, shape index: {}]
  %s2 = inlined_call_operand.vmem [shape: f32[2,8,32], index: 2, kind: input, shape index: {}]
  %s3 = inlined_call_operand.vmem [shape: f32[32,32], index: 3, kind: input, shape index: {}]
  %s4 = inlined_call_operand.vmem [shape: f32[32,64], index: 4, kind: input, shape index: {}]
  %s5 = inlined_call_operand.vmem [shape: f32[32,32], index: 5, kind: input, shape index: {}]
  %s6 = inlined_call_operand.vmem [shape: f32[4,32], index: 6, kind: input, shape index: {}]
  %s7 = inlined_call_operand.vmem [shape: f32[32,32], index: 7, kind: input, shape index: {}]
  %s8 = inlined_call_operand.vmem [shape: f32[32,64], index: 8, kind: input, shape index: {}]
  %s9 = inlined_call_operand.vmem [shape: f32[32,32], index: 9, kind: input, shape index: {}]
  %s10 = inlined_call_operand.vmem [shape: f32[4,32], index: 10, kind: input, shape index: {}]
  %s11 = inlined_call_operand.vmem [shape: f32[2,32], index: 11, kind: input, shape index: {}]
  %s12 = inlined_call_operand.vmem [shape: f32[2,32], index: 12, kind: input, shape index: {}]
  %s13 = inlined_call_operand.vmem [shape: f32[32,4], index: 13, kind: input, shape index: {}]
  %s14 = inlined_call_operand.vmem [shape: f32[1,4], index: 14, kind: input, shape index: {}]
  %s15 = inlined_call_operand.vmem [shape: f32[4,256], index: 15, kind: input, shape index: {}]
  %s16 = inlined_call_operand.vmem [shape: f32[32,256], index: 16, kind: input, shape index: {}]
  %s17 = inlined_call_operand.vmem [shape: f32[1,256], index: 17, kind: input, shape index: {}]
  %s18 = inlined_call_operand.vmem [shape: f32[256,32], index: 18, kind: input, shape index: {}]
  %s19 = inlined_call_operand.vmem [shape: f32[4,32], index: 19, kind: input, shape index: {}]
  %s20 = inlined_call_operand.vmem [shape: f32[2,16,32], index: 20, kind: output, shape index: {}]
  %s21 = sld [smem:[#allocation0]]
  $region113: #{share_de_layer_forward.1} parent=0
    _
  %s23 = ssub.s32 1, %s21
  %s24 = scalar_select 0, %s23, %s21
  loop: start=0, step=1, limit=4
  $region2: #{share_de_layer_forward.1} parent=0 // loop_pre_header
    _
  $region3: #{share_de_layer_forward.1} parent=0 // loop_header
    %s26 = sphi 0, %s30
    %p27 = scmp.ge.s32.totalorder %s26, 4
    %s34 = sphi 0, %s34
    %s36 = sphi 0, %s34
    %s37 = sphi 0, %s36
    %s51 = sphi 0, %s37
    %s57 = sphi 0, %s59
    %s60 = sphi 0, %s57
    %s61 = sphi 0, %s60
    %s77 = sphi 0, %s61
    %s83 = sphi 0, %s85
    %s86 = sphi 0, %s83
    %s87 = sphi 0, %s86
    %s103 = sphi 0, %s87
    %s107 = sphi 0, %s107
    %s109 = sphi 0, %s107
    %s110 = sphi 0, %s109
    %s124 = sphi 0, %s110
    %s128 = sphi 0, %s128
    %s130 = sphi 0, %s128
    %s131 = sphi 0, %s130
    %s145 = sphi 0, %s131
    %s149 = sphi 0, %s149
    %s151 = sphi 0, %s149
    %s152 = sphi 0, %s151
    %s166 = sphi 0, %s152
    %s170 = sphi 0, %s170
    %s172 = sphi 0, %s170
    %s173 = sphi 0, %s172
    %s187 = sphi 0, %s173
    %s191 = sphi 0, %s191
    %s193 = sphi 0, %s191
    %s194 = sphi 0, %s193
    %s208 = sphi 0, %s194
    %s212 = sphi 0, %s212
    %s214 = sphi 0, %s212
    %s215 = sphi 0, %s214
    %s229 = sphi 0, %s215
    %s233 = sphi 0, %s233
    %s235 = sphi 0, %s233
    %s236 = sphi 0, %s235
    %s250 = sphi 0, %s236
    %s254 = sphi 0, %s254
    %s256 = sphi 0, %s254
    %s257 = sphi 0, %s256
    %s271 = sphi 0, %s257
    %s275 = sphi 0, %s275
    %s277 = sphi 0, %s275
    %s278 = sphi 0, %s277
    %s292 = sphi 0, %s278
    %s296 = sphi 0, %s296
    %s298 = sphi 0, %s296
    %s299 = sphi 0, %s298
    %s313 = sphi 0, %s299
    %s317 = sphi 0, %s317
    %s319 = sphi 0, %s317
    %s320 = sphi 0, %s319
    %s334 = sphi 0, %s320
    %s338 = sphi 0, %s338
    %s340 = sphi 0, %s338
    %s341 = sphi 0, %s340
    %s355 = sphi 0, %s341
    %s359 = sphi 0, %s359
    %s361 = sphi 0, %s359
    %s362 = sphi 0, %s361
    %s376 = sphi 0, %s362
    %s380 = sphi 0, %s380
    %s382 = sphi 0, %s380
    %s383 = sphi 0, %s382
    %s397 = sphi 0, %s383
    %s401 = sphi 0, %s401
    %s403 = sphi 0, %s401
    %s404 = sphi 0, %s403
    %s418 = sphi 0, %s404
    %s422 = sphi 0, %s422
    %s424 = sphi 0, %s422
    %s425 = sphi 0, %s424
    %s439 = sphi 0, %s425
    %s443 = sphi 0, %s443
    %s445 = sphi 0, %s443
    %s446 = sphi 0, %s445
    %s460 = sphi 0, %s446
    %s466 = sphi 0, %s468
    %s469 = sphi 0, %s466
    %s470 = sphi 0, %s469
    %s486 = sphi 0, %s470
  $region4: #{share_de_layer_forward.1} parent=0 // loop_header_branch
    %29 = sbr.rel (%p27) target = $region8
  $region5: #{share_de_layer_forward.1} parent=0 // loop_body
    %s31 = ssub.s32 %s26, 1
    %s32 = ssub.s32 %s26, 2
    %s33 = sadd.s32 %s26, 1
    %s35 = sadd.s32 %s34, 1
    %p38 = scmp.eq.s32.totalorder %s26, 1
    %p39 = scmp.ne.s32.totalorder %s34, %s36
    %p40 = scmp.eq.s32.totalorder %s26, 0
    %p41 = por %p39, %p40
    %p42 = scmp.ne.s32.totalorder %s34, %s36
    %p43 = scmp.eq.s32.totalorder %s31, 1
    %p44 = por %p42, %p43
    %p45 = scmp.ne.s32.totalorder %s36, %s37
    %p46 = scmp.eq.s32.totalorder %s31, 0
    %p47 = por %p45, %p46
    %p48 = scmp.ne.s32.totalorder %s36, %s37
    %p49 = scmp.eq.s32.totalorder %s32, 1
    %p50 = por %p48, %p49
    %p52 = scmp.ne.s32.totalorder %s37, %s51
    %p53 = scmp.eq.s32.totalorder %s32, 0
    %p54 = por %p52, %p53
    %s55 = ssub.s32 %s26, %s33
    %p56 = scmp.eq.s32.totalorder %s55, 0
    %s58 = sadd.s32 %s57, 1
    %s59 = scalar_select %p56, %s57, %s58
    %p62 = pneg %p56
    %p63 = scmp.eq.s32.totalorder %s26, 1
    %p64 = por %p62, %p63
    %p65 = scmp.ne.s32.totalorder %s57, %s60
    %p66 = scmp.eq.s32.totalorder %s26, 0
    %p67 = por %p65, %p66
    %p68 = scmp.ne.s32.totalorder %s57, %s60
    %p69 = scmp.eq.s32.totalorder %s31, 1
    %p70 = por %p68, %p69
    %p71 = scmp.ne.s32.totalorder %s60, %s61
    %p72 = scmp.eq.s32.totalorder %s31, 0
    %p73 = por %p71, %p72
    %p74 = scmp.ne.s32.totalorder %s60, %s61
    %p75 = scmp.eq.s32.totalorder %s32, 1
    %p76 = por %p74, %p75
    %p78 = scmp.ne.s32.totalorder %s61, %s77
    %p79 = scmp.eq.s32.totalorder %s32, 0
    %p80 = por %p78, %p79
    %s81 = ssub.s32 %s26, %s33
    %p82 = scmp.eq.s32.totalorder %s81, 0
    %s84 = sadd.s32 %s83, 1
    %s85 = scalar_select %p82, %s83, %s84
    %p88 = pneg %p82
    %p89 = scmp.eq.s32.totalorder %s26, 1
    %p90 = por %p88, %p89
    %p91 = scmp.ne.s32.totalorder %s83, %s86
    %p92 = scmp.eq.s32.totalorder %s26, 0
    %p93 = por %p91, %p92
    %p94 = scmp.ne.s32.totalorder %s83, %s86
    %p95 = scmp.eq.s32.totalorder %s31, 1
    %p96 = por %p94, %p95
    %p97 = scmp.ne.s32.totalorder %s86, %s87
    %p98 = scmp.eq.s32.totalorder %s31, 0
    %p99 = por %p97, %p98
    %p100 = scmp.ne.s32.totalorder %s86, %s87
    %p101 = scmp.eq.s32.totalorder %s32, 1
    %p102 = por %p100, %p101
    %p104 = scmp.ne.s32.totalorder %s87, %s103
    %p105 = scmp.eq.s32.totalorder %s32, 0
    %p106 = por %p104, %p105
    %s108 = sadd.s32 %s107, 1
    %p111 = scmp.eq.s32.totalorder %s26, 1
    %p112 = scmp.ne.s32.totalorder %s107, %s109
    %p113 = scmp.eq.s32.totalorder %s26, 0
    %p114 = por %p112, %p113
    %p115 = scmp.ne.s32.totalorder %s107, %s109
    %p116 = scmp.eq.s32.totalorder %s31, 1
    %p117 = por %p115, %p116
    %p118 = scmp.ne.s32.totalorder %s109, %s110
    %p119 = scmp.eq.s32.totalorder %s31, 0
    %p120 = por %p118, %p119
    %p121 = scmp.ne.s32.totalorder %s109, %s110
    %p122 = scmp.eq.s32.totalorder %s32, 1
    %p123 = por %p121, %p122
    %p125 = scmp.ne.s32.totalorder %s110, %s124
    %p126 = scmp.eq.s32.totalorder %s32, 0
    %p127 = por %p125, %p126
    %s129 = sadd.s32 %s128, 1
    %p132 = scmp.eq.s32.totalorder %s26, 1
    %p133 = scmp.ne.s32.totalorder %s128, %s130
    %p134 = scmp.eq.s32.totalorder %s26, 0
    %p135 = por %p133, %p134
    %p136 = scmp.ne.s32.totalorder %s128, %s130
    %p137 = scmp.eq.s32.totalorder %s31, 1
    %p138 = por %p136, %p137
    %p139 = scmp.ne.s32.totalorder %s130, %s131
    %p140 = scmp.eq.s32.totalorder %s31, 0
    %p141 = por %p139, %p140
    %p142 = scmp.ne.s32.totalorder %s130, %s131
    %p143 = scmp.eq.s32.totalorder %s32, 1
    %p144 = por %p142, %p143
    %p146 = scmp.ne.s32.totalorder %s131, %s145
    %p147 = scmp.eq.s32.totalorder %s32, 0
    %p148 = por %p146, %p147
    %s150 = sadd.s32 %s149, 1
    %p153 = scmp.eq.s32.totalorder %s26, 1
    %p154 = scmp.ne.s32.totalorder %s149, %s151
    %p155 = scmp.eq.s32.totalorder %s26, 0
    %p156 = por %p154, %p155
    %p157 = scmp.ne.s32.totalorder %s149, %s151
    %p158 = scmp.eq.s32.totalorder %s31, 1
    %p159 = por %p157, %p158
    %p160 = scmp.ne.s32.totalorder %s151, %s152
    %p161 = scmp.eq.s32.totalorder %s31, 0
    %p162 = por %p160, %p161
    %p163 = scmp.ne.s32.totalorder %s151, %s152
    %p164 = scmp.eq.s32.totalorder %s32, 1
    %p165 = por %p163, %p164
    %p167 = scmp.ne.s32.totalorder %s152, %s166
    %p168 = scmp.eq.s32.totalorder %s32, 0
    %p169 = por %p167, %p168
    %s171 = sadd.s32 %s170, 1
    %p174 = scmp.eq.s32.totalorder %s26, 1
    %p175 = scmp.ne.s32.totalorder %s170, %s172
    %p176 = scmp.eq.s32.totalorder %s26, 0
    %p177 = por %p175, %p176
    %p178 = scmp.ne.s32.totalorder %s170, %s172
    %p179 = scmp.eq.s32.totalorder %s31, 1
    %p180 = por %p178, %p179
    %p181 = scmp.ne.s32.totalorder %s172, %s173
    %p182 = scmp.eq.s32.totalorder %s31, 0
    %p183 = por %p181, %p182
    %p184 = scmp.ne.s32.totalorder %s172, %s173
    %p185 = scmp.eq.s32.totalorder %s32, 1
    %p186 = por %p184, %p185
    %p188 = scmp.ne.s32.totalorder %s173, %s187
    %p189 = scmp.eq.s32.totalorder %s32, 0
    %p190 = por %p188, %p189
    %s192 = sadd.s32 %s191, 1
    %p195 = scmp.eq.s32.totalorder %s26, 1
    %p196 = scmp.ne.s32.totalorder %s191, %s193
    %p197 = scmp.eq.s32.totalorder %s26, 0
    %p198 = por %p196, %p197
    %p199 = scmp.ne.s32.totalorder %s191, %s193
    %p200 = scmp.eq.s32.totalorder %s31, 1
    %p201 = por %p199, %p200
    %p202 = scmp.ne.s32.totalorder %s193, %s194
    %p203 = scmp.eq.s32.totalorder %s31, 0
    %p204 = por %p202, %p203
    %p205 = scmp.ne.s32.totalorder %s193, %s194
    %p206 = scmp.eq.s32.totalorder %s32, 1
    %p207 = por %p205, %p206
    %p209 = scmp.ne.s32.totalorder %s194, %s208
    %p210 = scmp.eq.s32.totalorder %s32, 0
    %p211 = por %p209, %p210
    %s213 = sadd.s32 %s212, 1
    %p216 = scmp.eq.s32.totalorder %s26, 1
    %p217 = scmp.ne.s32.totalorder %s212, %s214
    %p218 = scmp.eq.s32.totalorder %s26, 0
    %p219 = por %p217, %p218
    %p220 = scmp.ne.s32.totalorder %s212, %s214
    %p221 = scmp.eq.s32.totalorder %s31, 1
    %p222 = por %p220, %p221
    %p223 = scmp.ne.s32.totalorder %s214, %s215
    %p224 = scmp.eq.s32.totalorder %s31, 0
    %p225 = por %p223, %p224
    %p226 = scmp.ne.s32.totalorder %s214, %s215
    %p227 = scmp.eq.s32.totalorder %s32, 1
    %p228 = por %p226, %p227
    %p230 = scmp.ne.s32.totalorder %s215, %s229
    %p231 = scmp.eq.s32.totalorder %s32, 0
    %p232 = por %p230, %p231
    %s234 = sadd.s32 %s233, 1
    %p237 = scmp.eq.s32.totalorder %s26, 1
    %p238 = scmp.ne.s32.totalorder %s233, %s235
    %p239 = scmp.eq.s32.totalorder %s26, 0
    %p240 = por %p238, %p239
    %p241 = scmp.ne.s32.totalorder %s233, %s235
    %p242 = scmp.eq.s32.totalorder %s31, 1
    %p243 = por %p241, %p242
    %p244 = scmp.ne.s32.totalorder %s235, %s236
    %p245 = scmp.eq.s32.totalorder %s31, 0
    %p246 = por %p244, %p245
    %p247 = scmp.ne.s32.totalorder %s235, %s236
    %p248 = scmp.eq.s32.totalorder %s32, 1
    %p249 = por %p247, %p248
    %p251 = scmp.ne.s32.totalorder %s236, %s250
    %p252 = scmp.eq.s32.totalorder %s32, 0
    %p253 = por %p251, %p252
    %s255 = sadd.s32 %s254, 1
    %p258 = scmp.eq.s32.totalorder %s26, 1
    %p259 = scmp.ne.s32.totalorder %s254, %s256
    %p260 = scmp.eq.s32.totalorder %s26, 0
    %p261 = por %p259, %p260
    %p262 = scmp.ne.s32.totalorder %s254, %s256
    %p263 = scmp.eq.s32.totalorder %s31, 1
    %p264 = por %p262, %p263
    %p265 = scmp.ne.s32.totalorder %s256, %s257
    %p266 = scmp.eq.s32.totalorder %s31, 0
    %p267 = por %p265, %p266
    %p268 = scmp.ne.s32.totalorder %s256, %s257
    %p269 = scmp.eq.s32.totalorder %s32, 1
    %p270 = por %p268, %p269
    %p272 = scmp.ne.s32.totalorder %s257, %s271
    %p273 = scmp.eq.s32.totalorder %s32, 0
    %p274 = por %p272, %p273
    %s276 = sadd.s32 %s275, 1
    %p279 = scmp.eq.s32.totalorder %s26, 1
    %p280 = scmp.ne.s32.totalorder %s275, %s277
    %p281 = scmp.eq.s32.totalorder %s26, 0
    %p282 = por %p280, %p281
    %p283 = scmp.ne.s32.totalorder %s275, %s277
    %p284 = scmp.eq.s32.totalorder %s31, 1
    %p285 = por %p283, %p284
    %p286 = scmp.ne.s32.totalorder %s277, %s278
    %p287 = scmp.eq.s32.totalorder %s31, 0
    %p288 = por %p286, %p287
    %p289 = scmp.ne.s32.totalorder %s277, %s278
    %p290 = scmp.eq.s32.totalorder %s32, 1
    %p291 = por %p289, %p290
    %p293 = scmp.ne.s32.totalorder %s278, %s292
    %p294 = scmp.eq.s32.totalorder %s32, 0
    %p295 = por %p293, %p294
    %s297 = sadd.s32 %s296, 1
    %p300 = scmp.eq.s32.totalorder %s26, 1
    %p301 = scmp.ne.s32.totalorder %s296, %s298
    %p302 = scmp.eq.s32.totalorder %s26, 0
    %p303 = por %p301, %p302
    %p304 = scmp.ne.s32.totalorder %s296, %s298
    %p305 = scmp.eq.s32.totalorder %s31, 1
    %p306 = por %p304, %p305
    %p307 = scmp.ne.s32.totalorder %s298, %s299
    %p308 = scmp.eq.s32.totalorder %s31, 0
    %p309 = por %p307, %p308
    %p310 = scmp.ne.s32.totalorder %s298, %s299
    %p311 = scmp.eq.s32.totalorder %s32, 1
    %p312 = por %p310, %p311
    %p314 = scmp.ne.s32.totalorder %s299, %s313
    %p315 = scmp.eq.s32.totalorder %s32, 0
    %p316 = por %p314, %p315
    %s318 = sadd.s32 %s317, 1
    %p321 = scmp.eq.s32.totalorder %s26, 1
    %p322 = scmp.ne.s32.totalorder %s317, %s319
    %p323 = scmp.eq.s32.totalorder %s26, 0
    %p324 = por %p322, %p323
    %p325 = scmp.ne.s32.totalorder %s317, %s319
    %p326 = scmp.eq.s32.totalorder %s31, 1
    %p327 = por %p325, %p326
    %p328 = scmp.ne.s32.totalorder %s319, %s320
    %p329 = scmp.eq.s32.totalorder %s31, 0
    %p330 = por %p328, %p329
    %p331 = scmp.ne.s32.totalorder %s319, %s320
    %p332 = scmp.eq.s32.totalorder %s32, 1
    %p333 = por %p331, %p332
    %p335 = scmp.ne.s32.totalorder %s320, %s334
    %p336 = scmp.eq.s32.totalorder %s32, 0
    %p337 = por %p335, %p336
    %s339 = sadd.s32 %s338, 1
    %p342 = scmp.eq.s32.totalorder %s26, 1
    %p343 = scmp.ne.s32.totalorder %s338, %s340
    %p344 = scmp.eq.s32.totalorder %s26, 0
    %p345 = por %p343, %p344
    %p346 = scmp.ne.s32.totalorder %s338, %s340
    %p347 = scmp.eq.s32.totalorder %s31, 1
    %p348 = por %p346, %p347
    %p349 = scmp.ne.s32.totalorder %s340, %s341
    %p350 = scmp.eq.s32.totalorder %s31, 0
    %p351 = por %p349, %p350
    %p352 = scmp.ne.s32.totalorder %s340, %s341
    %p353 = scmp.eq.s32.totalorder %s32, 1
    %p354 = por %p352, %p353
    %p356 = scmp.ne.s32.totalorder %s341, %s355
    %p357 = scmp.eq.s32.totalorder %s32, 0
    %p358 = por %p356, %p357
    %s360 = sadd.s32 %s359, 1
    %p363 = scmp.eq.s32.totalorder %s26, 1
    %p364 = scmp.ne.s32.totalorder %s359, %s361
    %p365 = scmp.eq.s32.totalorder %s26, 0
    %p366 = por %p364, %p365
    %p367 = scmp.ne.s32.totalorder %s359, %s361
    %p368 = scmp.eq.s32.totalorder %s31, 1
    %p369 = por %p367, %p368
    %p370 = scmp.ne.s32.totalorder %s361, %s362
    %p371 = scmp.eq.s32.totalorder %s31, 0
    %p372 = por %p370, %p371
    %p373 = scmp.ne.s32.totalorder %s361, %s362
    %p374 = scmp.eq.s32.totalorder %s32, 1
    %p375 = por %p373, %p374
    %p377 = scmp.ne.s32.totalorder %s362, %s376
    %p378 = scmp.eq.s32.totalorder %s32, 0
    %p379 = por %p377, %p378
    %s381 = sadd.s32 %s380, 1
    %p384 = scmp.eq.s32.totalorder %s26, 1
    %p385 = scmp.ne.s32.totalorder %s380, %s382
    %p386 = scmp.eq.s32.totalorder %s26, 0
    %p387 = por %p385, %p386
    %p388 = scmp.ne.s32.totalorder %s380, %s382
    %p389 = scmp.eq.s32.totalorder %s31, 1
    %p390 = por %p388, %p389
    %p391 = scmp.ne.s32.totalorder %s382, %s383
    %p392 = scmp.eq.s32.totalorder %s31, 0
    %p393 = por %p391, %p392
    %p394 = scmp.ne.s32.totalorder %s382, %s383
    %p395 = scmp.eq.s32.totalorder %s32, 1
    %p396 = por %p394, %p395
    %p398 = scmp.ne.s32.totalorder %s383, %s397
    %p399 = scmp.eq.s32.totalorder %s32, 0
    %p400 = por %p398, %p399
    %s402 = sadd.s32 %s401, 1
    %p405 = scmp.eq.s32.totalorder %s26, 1
    %p406 = scmp.ne.s32.totalorder %s401, %s403
    %p407 = scmp.eq.s32.totalorder %s26, 0
    %p408 = por %p406, %p407
    %p409 = scmp.ne.s32.totalorder %s401, %s403
    %p410 = scmp.eq.s32.totalorder %s31, 1
    %p411 = por %p409, %p410
    %p412 = scmp.ne.s32.totalorder %s403, %s404
    %p413 = scmp.eq.s32.totalorder %s31, 0
    %p414 = por %p412, %p413
    %p415 = scmp.ne.s32.totalorder %s403, %s404
    %p416 = scmp.eq.s32.totalorder %s32, 1
    %p417 = por %p415, %p416
    %p419 = scmp.ne.s32.totalorder %s404, %s418
    %p420 = scmp.eq.s32.totalorder %s32, 0
    %p421 = por %p419, %p420
    %s423 = sadd.s32 %s422, 1
    %p426 = scmp.eq.s32.totalorder %s26, 1
    %p427 = scmp.ne.s32.totalorder %s422, %s424
    %p428 = scmp.eq.s32.totalorder %s26, 0
    %p429 = por %p427, %p428
    %p430 = scmp.ne.s32.totalorder %s422, %s424
    %p431 = scmp.eq.s32.totalorder %s31, 1
    %p432 = por %p430, %p431
    %p433 = scmp.ne.s32.totalorder %s424, %s425
    %p434 = scmp.eq.s32.totalorder %s31, 0
    %p435 = por %p433, %p434
    %p436 = scmp.ne.s32.totalorder %s424, %s425
    %p437 = scmp.eq.s32.totalorder %s32, 1
    %p438 = por %p436, %p437
    %p440 = scmp.ne.s32.totalorder %s425, %s439
    %p441 = scmp.eq.s32.totalorder %s32, 0
    %p442 = por %p440, %p441
    %s444 = sadd.s32 %s443, 1
    %p447 = scmp.eq.s32.totalorder %s26, 1
    %p448 = scmp.ne.s32.totalorder %s443, %s445
    %p449 = scmp.eq.s32.totalorder %s26, 0
    %p450 = por %p448, %p449
    %p451 = scmp.ne.s32.totalorder %s443, %s445
    %p452 = scmp.eq.s32.totalorder %s31, 1
    %p453 = por %p451, %p452
    %p454 = scmp.ne.s32.totalorder %s445, %s446
    %p455 = scmp.eq.s32.totalorder %s31, 0
    %p456 = por %p454, %p455
    %p457 = scmp.ne.s32.totalorder %s445, %s446
    %p458 = scmp.eq.s32.totalorder %s32, 1
    %p459 = por %p457, %p458
    %p461 = scmp.ne.s32.totalorder %s446, %s460
    %p462 = scmp.eq.s32.totalorder %s32, 0
    %p463 = por %p461, %p462
    %s464 = ssub.s32 %s26, %s33
    %p465 = scmp.eq.s32.totalorder %s464, 0
    %s467 = sadd.s32 %s466, 1
    %s468 = scalar_select %p465, %s466, %s467
    %p471 = pneg %p465
    %p472 = scmp.eq.s32.totalorder %s26, 1
    %p473 = por %p471, %p472
    %p474 = scmp.ne.s32.totalorder %s466, %s469
    %p475 = scmp.eq.s32.totalorder %s26, 0
    %p476 = por %p474, %p475
    %p477 = scmp.ne.s32.totalorder %s466, %s469
    %p478 = scmp.eq.s32.totalorder %s31, 1
    %p479 = por %p477, %p478
    %p480 = scmp.ne.s32.totalorder %s469, %s470
    %p481 = scmp.eq.s32.totalorder %s31, 0
    %p482 = por %p480, %p481
    %p483 = scmp.ne.s32.totalorder %s469, %s470
    %p484 = scmp.eq.s32.totalorder %s32, 1
    %p485 = por %p483, %p484
    %p487 = scmp.ne.s32.totalorder %s470, %s486
    %p488 = scmp.eq.s32.totalorder %s32, 0
    %p489 = por %p487, %p488
    %p490 = scmp.le.s32.totalorder 1, %s26
    %p491 = scmp.lt.s32.totalorder %s26, 3
    %p492 = pnand %p490, %p491
    %p493 = pneg %p492
    // Predicated region
    $region9: #{share_de_layer_forward.1} parent=5 // pred_check
      _
    $region10: #{share_de_layer_forward.1} parent=5 // pred_check_branch
      %495 = sbr.rel (%p492) target = $region12
    $region11: #{share_de_layer_forward.1} parent=5 // pred_region
      %s496 = ssub.s32 %s26, 1
      // Predicated region
      $region13: #{share_de_layer_forward.1} parent=11 // pred_check
        %p497 = pneg %p47
      $region14: #{share_de_layer_forward.1} parent=11 // pred_check_branch
        %499 = sbr.rel (%p497) target = $region16
      $region15: #{share_de_layer_forward.1} parent=11 // pred_region
        _
      $region16: #{share_de_layer_forward.1} parent=11 // pred_fallthru
        _
      // Predicated region
      $region17: #{share_de_layer_forward.1} parent=11 // pred_check
        %p500 = pneg %p120
      $region18: #{share_de_layer_forward.1} parent=11 // pred_check_branch
        %502 = sbr.rel (%p500) target = $region20
      $region19: #{share_de_layer_forward.1} parent=11 // pred_region
        _
      $region20: #{share_de_layer_forward.1} parent=11 // pred_fallthru
        _
      // Predicated region
      $region21: #{share_de_layer_forward.1} parent=11 // pred_check
        %p503 = pneg %p141
      $region22: #{share_de_layer_forward.1} parent=11 // pred_check_branch
        %505 = sbr.rel (%p503) target = $region24
      $region23: #{share_de_layer_forward.1} parent=11 // pred_region
        _
      $region24: #{share_de_layer_forward.1} parent=11 // pred_fallthru
        _
      // Predicated region
      $region25: #{share_de_layer_forward.1} parent=11 // pred_check
        %p506 = pneg %p162
      $region26: #{share_de_layer_forward.1} parent=11 // pred_check_branch
        %508 = sbr.rel (%p506) target = $region28
      $region27: #{share_de_layer_forward.1} parent=11 // pred_region
        _
      $region28: #{share_de_layer_forward.1} parent=11 // pred_fallthru
        _
      // Predicated region
      $region29: #{share_de_layer_forward.1} parent=11 // pred_check
        %p509 = pneg %p183
      $region30: #{share_de_layer_forward.1} parent=11 // pred_check_branch
        %511 = sbr.rel (%p509) target = $region32
      $region31: #{share_de_layer_forward.1} parent=11 // pred_region
        _
      $region32: #{share_de_layer_forward.1} parent=11 // pred_fallthru
        _
      // Predicated region
      $region33: #{share_de_layer_forward.1} parent=11 // pred_check
        %p512 = pneg %p204
      $region34: #{share_de_layer_forward.1} parent=11 // pred_check_branch
        %514 = sbr.rel (%p512) target = $region36
      $region35: #{share_de_layer_forward.1} parent=11 // pred_region
        _
      $region36: #{share_de_layer_forward.1} parent=11 // pred_fallthru
        _
      // Predicated region
      $region37: #{share_de_layer_forward.1} parent=11 // pred_check
        %p515 = pneg %p225
      $region38: #{share_de_layer_forward.1} parent=11 // pred_check_branch
        %517 = sbr.rel (%p515) target = $region40
      $region39: #{share_de_layer_forward.1} parent=11 // pred_region
        _
      $region40: #{share_de_layer_forward.1} parent=11 // pred_fallthru
        _
      // Predicated region
      $region41: #{share_de_layer_forward.1} parent=11 // pred_check
        %p518 = pneg %p246
      $region42: #{share_de_layer_forward.1} parent=11 // pred_check_branch
        %520 = sbr.rel (%p518) target = $region44
      $region43: #{share_de_layer_forward.1} parent=11 // pred_region
        _
      $region44: #{share_de_layer_forward.1} parent=11 // pred_fallthru
        _
      // Predicated region
      $region45: #{share_de_layer_forward.1} parent=11 // pred_check
        %p521 = pneg %p267
      $region46: #{share_de_layer_forward.1} parent=11 // pred_check_branch
        %523 = sbr.rel (%p521) target = $region48
      $region47: #{share_de_layer_forward.1} parent=11 // pred_region
        _
      $region48: #{share_de_layer_forward.1} parent=11 // pred_fallthru
        _
      // Predicated region
      $region49: #{share_de_layer_forward.1} parent=11 // pred_check
        %p524 = pneg %p288
      $region50: #{share_de_layer_forward.1} parent=11 // pred_check_branch
        %526 = sbr.rel (%p524) target = $region52
      $region51: #{share_de_layer_forward.1} parent=11 // pred_region
        _
      $region52: #{share_de_layer_forward.1} parent=11 // pred_fallthru
        _
      // Predicated region
      $region53: #{share_de_layer_forward.1} parent=11 // pred_check
        %p527 = pneg %p309
      $region54: #{share_de_layer_forward.1} parent=11 // pred_check_branch
        %529 = sbr.rel (%p527) target = $region56
      $region55: #{share_de_layer_forward.1} parent=11 // pred_region
        _
      $region56: #{share_de_layer_forward.1} parent=11 // pred_fallthru
        _
      // Predicated region
      $region57: #{share_de_layer_forward.1} parent=11 // pred_check
        %p530 = pneg %p330
      $region58: #{share_de_layer_forward.1} parent=11 // pred_check_branch
        %532 = sbr.rel (%p530) target = $region60
      $region59: #{share_de_layer_forward.1} parent=11 // pred_region
        _
      $region60: #{share_de_layer_forward.1} parent=11 // pred_fallthru
        _
      // Predicated region
      $region61: #{share_de_layer_forward.1} parent=11 // pred_check
        %p533 = pneg %p351
      $region62: #{share_de_layer_forward.1} parent=11 // pred_check_branch
        %535 = sbr.rel (%p533) target = $region64
      $region63: #{share_de_layer_forward.1} parent=11 // pred_region
        _
      $region64: #{share_de_layer_forward.1} parent=11 // pred_fallthru
        _
      // Predicated region
      $region65: #{share_de_layer_forward.1} parent=11 // pred_check
        %p536 = pneg %p372
      $region66: #{share_de_layer_forward.1} parent=11 // pred_check_branch
        %538 = sbr.rel (%p536) target = $region68
      $region67: #{share_de_layer_forward.1} parent=11 // pred_region
        _
      $region68: #{share_de_layer_forward.1} parent=11 // pred_fallthru
        _
      // Predicated region
      $region69: #{share_de_layer_forward.1} parent=11 // pred_check
        %p539 = pneg %p393
      $region70: #{share_de_layer_forward.1} parent=11 // pred_check_branch
        %541 = sbr.rel (%p539) target = $region72
      $region71: #{share_de_layer_forward.1} parent=11 // pred_region
        _
      $region72: #{share_de_layer_forward.1} parent=11 // pred_fallthru
        _
      // Predicated region
      $region73: #{share_de_layer_forward.1} parent=11 // pred_check
        %p542 = pneg %p414
      $region74: #{share_de_layer_forward.1} parent=11 // pred_check_branch
        %544 = sbr.rel (%p542) target = $region76
      $region75: #{share_de_layer_forward.1} parent=11 // pred_region
        _
      $region76: #{share_de_layer_forward.1} parent=11 // pred_fallthru
        _
      // Predicated region
      $region77: #{share_de_layer_forward.1} parent=11 // pred_check
        %p545 = pneg %p435
      $region78: #{share_de_layer_forward.1} parent=11 // pred_check_branch
        %547 = sbr.rel (%p545) target = $region80
      $region79: #{share_de_layer_forward.1} parent=11 // pred_region
        _
      $region80: #{share_de_layer_forward.1} parent=11 // pred_fallthru
        _
      // Predicated region
      $region81: #{share_de_layer_forward.1} parent=11 // pred_check
        %p548 = pneg %p456
      $region82: #{share_de_layer_forward.1} parent=11 // pred_check_branch
        %550 = sbr.rel (%p548) target = $region84
      $region83: #{share_de_layer_forward.1} parent=11 // pred_region
        _
      $region84: #{share_de_layer_forward.1} parent=11 // pred_fallthru
        _
    $region12: #{share_de_layer_forward.1} parent=5 // pred_fallthru
      _
    %p551 = scmp.lt.s32.totalorder %s26, 2
    // Predicated region
    $region85: #{share_de_layer_forward.1} parent=5 // pred_check
      %p552 = pneg %p551
    $region86: #{share_de_layer_forward.1} parent=5 // pred_check_branch
      %554 = sbr.rel (%p552) target = $region88
    $region87: #{share_de_layer_forward.1} parent=5 // pred_region
      // Predicated region
      $region89: #{share_de_layer_forward.1} parent=87 // pred_check
        %p555 = pneg %p67
      $region90: #{share_de_layer_forward.1} parent=87 // pred_check_branch
        %557 = sbr.rel (%p555) target = $region92
      $region91: #{share_de_layer_forward.1} parent=87 // pred_region
        %p558 = scmp.lt.s32.totalorder %s26, 1
        %s559 = scalar_select %p558, %s26, 1
        %s560 = smul.addr %s559, 8
        %s561 = scalar_lea.vmem %s1, %s560
      $region92: #{share_de_layer_forward.1} parent=87 // pred_fallthru
        _
      // Predicated region
      $region93: #{share_de_layer_forward.1} parent=87 // pred_check
        %p562 = pneg %p93
      $region94: #{share_de_layer_forward.1} parent=87 // pred_check_branch
        %564 = sbr.rel (%p562) target = $region96
      $region95: #{share_de_layer_forward.1} parent=87 // pred_region
        %p565 = scmp.lt.s32.totalorder %s26, 1
        %s566 = scalar_select %p565, %s26, 1
        %s567 = smul.addr %s566, 8
        %s568 = scalar_lea.vmem %s2, %s567
      $region96: #{share_de_layer_forward.1} parent=87 // pred_fallthru
        _
    $region88: #{share_de_layer_forward.1} parent=5 // pred_fallthru
      _
    %p569 = scmp.le.s32.totalorder 1, %s26
    %p570 = scmp.lt.s32.totalorder %s26, 3
    %p571 = pnand %p569, %p570
    %p572 = pneg %p571
    // Predicated region
    $region97: #{share_de_layer_forward.1} parent=5 // pred_check
      _
    $region98: #{share_de_layer_forward.1} parent=5 // pred_check_branch
      %574 = sbr.rel (%p571) target = $region100
    $region99: #{share_de_layer_forward.1} parent=5 // pred_region
      %s575 = ssub.s32 %s26, 1
      %p576 = pneg %p47
      %p577 = pneg %p44
      %p578 = scmp.lt.s32.totalorder %s31, 1
      %s579 = scalar_select %p578, %s31, 1
      %s580 = smul.addr %s579, 8
      %s581 = scalar_lea.vmem %s1, %s580
      %p582 = pneg %p73
      %p583 = pneg %p70
      %p584 = scmp.lt.s32.totalorder %s31, 1
      %s585 = scalar_select %p584, %s31, 1
      %s586 = smul.addr %s585, 8
      %s587 = scalar_lea.vmem %s2, %s586
      %p588 = pneg %p99
      %p589 = pneg %p96
      %p590 = pneg %p120
      %p591 = pneg %p117
      %p592 = pneg %p141
      %p593 = pneg %p138
      %p594 = pneg %p162
      %p595 = pneg %p159
      %p596 = pneg %p183
      %p597 = pneg %p180
      %p598 = pneg %p204
      %p599 = pneg %p201
      %p600 = pneg %p225
      %p601 = pneg %p222
      %p602 = pneg %p246
      %p603 = pneg %p243
      %p604 = pneg %p267
      %p605 = pneg %p264
      %p606 = pneg %p288
      %p607 = pneg %p285
      %p608 = pneg %p309
      %p609 = pneg %p306
      %p610 = pneg %p330
      %p611 = pneg %p327
      %p612 = pneg %p351
      %p613 = pneg %p348
      %p614 = pneg %p372
      %p615 = pneg %p369
      %p616 = pneg %p393
      %p617 = pneg %p390
      %p618 = pneg %p414
      %p619 = pneg %p411
      %p620 = pneg %p435
      %p621 = pneg %p432
      %p622 = pneg %p456
      %p623 = pneg %p453
      %p624 = pneg %p482
      %p625 = pneg %p479
      %p626 = scmp.lt.s32.totalorder %s31, 1
      %s627 = scalar_select %p626, %s31, 1
      %s628 = smul.addr %s627, 2
      %s629 = smul.addr %s628, 8
      %s630 = scalar_lea.vmem %s20, %s629
      %p631 = scmp.lt.s32.totalorder %s31, 1
      %s632 = scalar_select %p631, %s31, 1
      %s633 = smul.addr %s632, 8
      %s634 = scalar_lea.vmem %s1, %s633
      %p635 = scmp.lt.s32.totalorder %s31, 1
      %s636 = scalar_select %p635, %s31, 1
      %s637 = smul.addr %s636, 8
      %s638 = scalar_lea.vmem %s2, %s637
      %p639 = scmp.lt.s32.totalorder %s31, 1
      %s640 = scalar_select %p639, %s31, 1
      %s641 = smul.addr %s640, 2
      %s642 = smul.addr %s641, 8
      %s643 = scalar_lea.vmem %s20, %s642
      %v644 = vld [vmem:[%s0] sm:$0xff]
      %v645 = vld [vmem:[%s0 + $0x8] sm:$0xff]
      %v646 = vld [vmem:[%s634] sm:$0xff]
      %v647 = vld [vmem:[%s638] sm:$0xff]
      %v648 = vld [vmem:[%s6] sm:$0xf]
      %v649 = vld [vmem:[%s3] sm:$0xff]
      %v650 = vld [vmem:[%s3 + $0x8] sm:$0xff]
      %v651 = vld [vmem:[%s3 + $0x10] sm:$0xff]
      %v652 = vld [vmem:[%s3 + $0x18] sm:$0xff]
      %v653 = vperm.slane %v648, 0
      %vm654 = vcmask 261120
      %v656 = vsel %vm654, %v644, 0
      %v659 = vsel %vm654, %v645, 0
      %661 = vmatpush.msra.mxu0 0.0
      %662 = vmatpush.msra.mxu0 0.0
      %663 = vmatpush.msra.mxu0 0.0
      %664 = vmatpush.msra.mxu0 0.0
      %665 = vmatpush.msra.mxu0 0.0
      %666 = vmatpush.msra.mxu0 0.0
      %667 = vmatpush.msra.mxu0 0.0
      %668 = vmatpush.msra.mxu0 0.0
      %669 = vmatpush.msra.mxu0 0.0
      %670 = vmatpush.msra.mxu0 0.0
      %671 = vmatpush.msra.mxu0 0.0
      %672 = vmatpush.msra.mxu0 0.0
      %673 = vmatpush.msra.mxu0 %v652
      %674 = vmatpush.msra.mxu0 %v651
      %675 = vmatpush.msra.mxu0 %v650
      %676 = vmatpush.msra.mxu0 %v649
      %677 = vmatmul.f32.gmra.mxu0 %v656
      %v678 = vpop.f32.mrf.mxu0
      %v679 = vadd.f32 %v653, %v678
      %680 = vmatmul.f32.gmra.mxu0 %v659
      %v681 = vpop.f32.mrf.mxu0
      %v682 = vadd.f32 %v653, %v681
      %683 = vdwg.mxu0
      %v684 = vld [vmem:[%s4] sm:$0xff]
      %v685 = vld [vmem:[%s4 + $0x8] sm:$0xff]
      %v686 = vld [vmem:[%s4 + $0x10] sm:$0xff]
      %v687 = vld [vmem:[%s4 + $0x18] sm:$0xff]
      %v689 = vsel %vm654, %v646, 0
      %691 = vmatpush.msra.mxu0 0.0
      %692 = vmatpush.msra.mxu0 0.0
      %693 = vmatpush.msra.mxu0 0.0
      %694 = vmatpush.msra.mxu0 0.0
      %695 = vmatpush.msra.mxu0 0.0
      %696 = vmatpush.msra.mxu0 0.0
      %697 = vmatpush.msra.mxu0 0.0
      %698 = vmatpush.msra.mxu0 0.0
      %699 = vmatpush.msra.mxu0 0.0
      %700 = vmatpush.msra.mxu0 0.0
      %701 = vmatpush.msra.mxu0 0.0
      %702 = vmatpush.msra.mxu0 0.0
      %703 = vmatpush.msra.mxu0 %v687
      %704 = vmatpush.msra.mxu0 %v686
      %705 = vmatpush.msra.mxu0 %v685
      %706 = vmatpush.msra.mxu0 %v684
      %707 = vmatmul.f32.gmra.mxu0 %v689
      %v708 = vpop.f32.mrf.mxu0
      %v709 = vadd.f32 0.0, %v708
      %710 = vdwg.mxu0
      %v711 = vperm.slane %v648, 1
      %v712 = vadd.f32 %v709, %v711
      %v713 = vperm.slane %v648, 2
      %715 = vrot.lane.b32.xlu0 %v713, 32
      %v716 = vpop.permute.xlu0 %715
      %v718 = vadd.f32 %v709, %v716
      %vm719 = vcmask 64512
      %v721 = vsel %vm719, %v679, 0
      %v724 = vsel %vm719, %v682, 0
      %v727 = vsel %vm719, %v712, 0
      %729 = vmatpush.xpose.msra.mxu0 0.0
      %730 = vmatpush.xpose.msra.mxu0 0.0
      %731 = vmatpush.xpose.msra.mxu0 0.0
      %732 = vmatpush.xpose.msra.mxu0 0.0
      %733 = vmatpush.xpose.msra.mxu0 0.0
      %734 = vmatpush.xpose.msra.mxu0 0.0
      %735 = vmatpush.xpose.msra.mxu0 0.0
      %736 = vmatpush.xpose.msra.mxu0 0.0
      %737 = vmatpush.xpose.msra.mxu0 0.0
      %738 = vmatpush.xpose.msra.mxu0 0.0
      %739 = vmatpush.xpose.msra.mxu0 0.0
      %740 = vmatpush.xpose.msra.mxu0 0.0
      %741 = vmatpush.xpose.msra.mxu0 0.0
      %742 = vmatpush.xpose.msra.mxu0 0.0
      %743 = vmatpush.xpose.msra.mxu0 0.0
      %744 = vmatpush.xpose.msra.mxu0 %v727
      %745 = vmatmul.f32.gmra.mxu0 %v721
      %v746 = vpop.f32.mrf.mxu0
      %v747 = vadd.f32 0.0, %v746
      %748 = vmatmul.f32.gmra.mxu0 %v724
      %v749 = vpop.f32.mrf.mxu0
      %v750 = vadd.f32 0.0, %v749
      %751 = vdwg.mxu0
      %752 = vrot.lane.b32.xlu0 %v679, 120
      %v753 = vpop.permute.xlu0 %752
      %754 = vrot.lane.b32.xlu0 %v682, 120
      %v755 = vpop.permute.xlu0 %754
      %756 = vrot.lane.b32.xlu0 %v712, 120
      %v757 = vpop.permute.xlu0 %756
      %v758 = vsel %vm719, %v753, 0
      %v760 = vsel %vm719, %v755, 0
      %v762 = vsel %vm719, %v757, 0
      %764 = vmatpush.xpose.msra.mxu0 0.0
      %765 = vmatpush.xpose.msra.mxu0 0.0
      %766 = vmatpush.xpose.msra.mxu0 0.0
      %767 = vmatpush.xpose.msra.mxu0 0.0
      %768 = vmatpush.xpose.msra.mxu0 0.0
      %769 = vmatpush.xpose.msra.mxu0 0.0
      %770 = vmatpush.xpose.msra.mxu0 0.0
      %771 = vmatpush.xpose.msra.mxu0 0.0
      %772 = vmatpush.xpose.msra.mxu0 0.0
      %773 = vmatpush.xpose.msra.mxu0 0.0
      %774 = vmatpush.xpose.msra.mxu0 0.0
      %775 = vmatpush.xpose.msra.mxu0 0.0
      %776 = vmatpush.xpose.msra.mxu0 0.0
      %777 = vmatpush.xpose.msra.mxu0 0.0
      %778 = vmatpush.xpose.msra.mxu0 0.0
      %779 = vmatpush.xpose.msra.mxu0 %v762
      %780 = vmatmul.f32.gmra.mxu0 %v758
      %v781 = vpop.f32.mrf.mxu0
      %v782 = vadd.f32 0.0, %v781
      %783 = vmatmul.f32.gmra.mxu0 %v760
      %v784 = vpop.f32.mrf.mxu0
      %v785 = vadd.f32 0.0, %v784
      %786 = vdwg.mxu0
      %787 = vrot.lane.b32.xlu0 %v679, 112
      %v788 = vpop.permute.xlu0 %787
      %789 = vrot.lane.b32.xlu0 %v682, 112
      %v790 = vpop.permute.xlu0 %789
      %791 = vrot.lane.b32.xlu0 %v712, 112
      %v792 = vpop.permute.xlu0 %791
      %v793 = vsel %vm719, %v788, 0
      %v795 = vsel %vm719, %v790, 0
      %v797 = vsel %vm719, %v792, 0
      %799 = vmatpush.xpose.msra.mxu0 0.0
      %800 = vmatpush.xpose.msra.mxu0 0.0
      %801 = vmatpush.xpose.msra.mxu0 0.0
      %802 = vmatpush.xpose.msra.mxu0 0.0
      %803 = vmatpush.xpose.msra.mxu0 0.0
      %804 = vmatpush.xpose.msra.mxu0 0.0
      %805 = vmatpush.xpose.msra.mxu0 0.0
      %806 = vmatpush.xpose.msra.mxu0 0.0
      %807 = vmatpush.xpose.msra.mxu0 0.0
      %808 = vmatpush.xpose.msra.mxu0 0.0
      %809 = vmatpush.xpose.msra.mxu0 0.0
      %810 = vmatpush.xpose.msra.mxu0 0.0
      %811 = vmatpush.xpose.msra.mxu0 0.0
      %812 = vmatpush.xpose.msra.mxu0 0.0
      %813 = vmatpush.xpose.msra.mxu0 0.0
      %814 = vmatpush.xpose.msra.mxu0 %v797
      %815 = vmatmul.f32.gmra.mxu0 %v793
      %v816 = vpop.f32.mrf.mxu0
      %v817 = vadd.f32 0.0, %v816
      %818 = vmatmul.f32.gmra.mxu0 %v795
      %v819 = vpop.f32.mrf.mxu0
      %v820 = vadd.f32 0.0, %v819
      %821 = vdwg.mxu0
      %822 = vrot.lane.b32.xlu0 %v679, 104
      %v823 = vpop.permute.xlu0 %822
      %824 = vrot.lane.b32.xlu0 %v682, 104
      %v825 = vpop.permute.xlu0 %824
      %826 = vrot.lane.b32.xlu0 %v712, 104
      %v827 = vpop.permute.xlu0 %826
      %v828 = vsel %vm719, %v823, 0
      %v830 = vsel %vm719, %v825, 0
      %v832 = vsel %vm719, %v827, 0
      %834 = vmatpush.xpose.msra.mxu0 0.0
      %835 = vmatpush.xpose.msra.mxu0 0.0
      %836 = vmatpush.xpose.msra.mxu0 0.0
      %837 = vmatpush.xpose.msra.mxu0 0.0
      %838 = vmatpush.xpose.msra.mxu0 0.0
      %839 = vmatpush.xpose.msra.mxu0 0.0
      %840 = vmatpush.xpose.msra.mxu0 0.0
      %841 = vmatpush.xpose.msra.mxu0 0.0
      %842 = vmatpush.xpose.msra.mxu0 0.0
      %843 = vmatpush.xpose.msra.mxu0 0.0
      %844 = vmatpush.xpose.msra.mxu0 0.0
      %845 = vmatpush.xpose.msra.mxu0 0.0
      %846 = vmatpush.xpose.msra.mxu0 0.0
      %847 = vmatpush.xpose.msra.mxu0 0.0
      %848 = vmatpush.xpose.msra.mxu0 0.0
      %849 = vmatpush.xpose.msra.mxu0 %v832
      %850 = vmatmul.f32.gmra.mxu0 %v828
      %v851 = vpop.f32.mrf.mxu0
      %v852 = vadd.f32 0.0, %v851
      %853 = vmatmul.f32.gmra.mxu0 %v830
      %v854 = vpop.f32.mrf.mxu0
      %v855 = vadd.f32 0.0, %v854
      %856 = vdwg.mxu0
      %v857 = vsel %vm719, %v747, -inf
      %858 = vmax.xlane.f32.xlu0 %v857
      %v859 = vpop.xlane.xlu0 %858
      %v860 = vsel %vm719, %v750, -inf
      %861 = vmax.xlane.f32.xlu0 %v860
      %v862 = vpop.xlane.xlu0 %861
      %v863 = vsel %vm719, %v782, -inf
      %864 = vmax.xlane.f32.xlu0 %v863
      %v865 = vpop.xlane.xlu0 %864
      %v866 = vsel %vm719, %v785, -inf
      %867 = vmax.xlane.f32.xlu0 %v866
      %v868 = vpop.xlane.xlu0 %867
      %v869 = vsel %vm719, %v817, -inf
      %870 = vmax.xlane.f32.xlu0 %v869
      %v871 = vpop.xlane.xlu0 %870
      %v872 = vsel %vm719, %v820, -inf
      %873 = vmax.xlane.f32.xlu0 %v872
      %v874 = vpop.xlane.xlu0 %873
      %v875 = vsel %vm719, %v852, -inf
      %876 = vmax.xlane.f32.xlu0 %v875
      %v877 = vpop.xlane.xlu0 %876
      %v878 = vsel %vm719, %v855, -inf
      %879 = vmax.xlane.f32.xlu0 %v878
      %v880 = vpop.xlane.xlu0 %879
      %v881 = vsub.f32 %v747, %v859
      %v882 = vsub.f32 %v750, %v862
      %v883 = vsub.f32 %v782, %v865
      %v884 = vsub.f32 %v785, %v868
      %v885 = vsub.f32 %v817, %v871
      %v886 = vsub.f32 %v820, %v874
      %v887 = vsub.f32 %v852, %v877
      %v888 = vsub.f32 %v855, %v880
      %v889 = vmul.f32 %v881, 1.442695
      %v890 = vpow.pop %v889
      %v891 = vmul.f32 %v882, 1.442695
      %v892 = vpow.pop %v891
      %v893 = vmul.f32 %v883, 1.442695
      %v894 = vpow.pop %v893
      %v895 = vmul.f32 %v884, 1.442695
      %v896 = vpow.pop %v895
      %v897 = vmul.f32 %v885, 1.442695
      %v898 = vpow.pop %v897
      %v899 = vmul.f32 %v886, 1.442695
      %v900 = vpow.pop %v899
      %v901 = vmul.f32 %v887, 1.442695
      %v902 = vpow.pop %v901
      %v903 = vmul.f32 %v888, 1.442695
      %v904 = vpow.pop %v903
      %v905 = vsel %vm719, %v890, 0.0
      %906 = vadd.xlane.f32.xlu0 %v905
      %v907 = vpop.xlane.xlu0 %906
      %v908 = vsel %vm719, %v892, 0.0
      %909 = vadd.xlane.f32.xlu0 %v908
      %v910 = vpop.xlane.xlu0 %909
      %v911 = vsel %vm719, %v894, 0.0
      %912 = vadd.xlane.f32.xlu0 %v911
      %v913 = vpop.xlane.xlu0 %912
      %v914 = vsel %vm719, %v896, 0.0
      %915 = vadd.xlane.f32.xlu0 %v914
      %v916 = vpop.xlane.xlu0 %915
      %v917 = vsel %vm719, %v898, 0.0
      %918 = vadd.xlane.f32.xlu0 %v917
      %v919 = vpop.xlane.xlu0 %918
      %v920 = vsel %vm719, %v900, 0.0
      %921 = vadd.xlane.f32.xlu0 %v920
      %v922 = vpop.xlane.xlu0 %921
      %v923 = vsel %vm719, %v902, 0.0
      %924 = vadd.xlane.f32.xlu0 %v923
      %v925 = vpop.xlane.xlu0 %924
      %v926 = vsel %vm719, %v904, 0.0
      %927 = vadd.xlane.f32.xlu0 %v926
      %v928 = vpop.xlane.xlu0 %927
      %v929 = vrcp.pop %v907
      %v930 = vmul.f32 %v907, %v929
      %v931 = vsub.f32 1.0, %v930
      %v932 = vmul.f32 %v929, %v931
      %v933 = vadd.f32 %v929, %v932
      %vm934 = vweird.f32 %v907
      %vm935 = vweird.f32 %v929
      %vm936 = vmor %vm934, %vm935
      %v937 = vsel %vm936, %v929, %v933
      %v938 = vand.u32 2147483647, %v907
      %vm939 = vcmp.eq.f32.partialorder %v938, 8.507059e+37
      %v940 = vand.u32 %v907, 2147483648
      %v941 = vor.u32 1.1754944e-38, %v940
      %v942 = vsel %vm939, %v941, %v937
      %v943 = vmul.f32 %v890, %v942
      %v944 = vrcp.pop %v910
      %v945 = vmul.f32 %v910, %v944
      %v946 = vsub.f32 1.0, %v945
      %v947 = vmul.f32 %v944, %v946
      %v948 = vadd.f32 %v944, %v947
      %vm949 = vweird.f32 %v910
      %vm950 = vweird.f32 %v944
      %vm951 = vmor %vm949, %vm950
      %v952 = vsel %vm951, %v944, %v948
      %v953 = vand.u32 2147483647, %v910
      %vm954 = vcmp.eq.f32.partialorder %v953, 8.507059e+37
      %v955 = vand.u32 %v910, 2147483648
      %v956 = vor.u32 1.1754944e-38, %v955
      %v957 = vsel %vm954, %v956, %v952
      %v958 = vmul.f32 %v892, %v957
      %v959 = vrcp.pop %v913
      %v960 = vmul.f32 %v913, %v959
      %v961 = vsub.f32 1.0, %v960
      %v962 = vmul.f32 %v959, %v961
      %v963 = vadd.f32 %v959, %v962
      %vm964 = vweird.f32 %v913
      %vm965 = vweird.f32 %v959
      %vm966 = vmor %vm964, %vm965
      %v967 = vsel %vm966, %v959, %v963
      %v968 = vand.u32 2147483647, %v913
      %vm969 = vcmp.eq.f32.partialorder %v968, 8.507059e+37
      %v970 = vand.u32 %v913, 2147483648
      %v971 = vor.u32 1.1754944e-38, %v970
      %v972 = vsel %vm969, %v971, %v967
      %v973 = vmul.f32 %v894, %v972
      %v974 = vrcp.pop %v916
      %v975 = vmul.f32 %v916, %v974
      %v976 = vsub.f32 1.0, %v975
      %v977 = vmul.f32 %v974, %v976
      %v978 = vadd.f32 %v974, %v977
      %vm979 = vweird.f32 %v916
      %vm980 = vweird.f32 %v974
      %vm981 = vmor %vm979, %vm980
      %v982 = vsel %vm981, %v974, %v978
      %v983 = vand.u32 2147483647, %v916
      %vm984 = vcmp.eq.f32.partialorder %v983, 8.507059e+37
      %v985 = vand.u32 %v916, 2147483648
      %v986 = vor.u32 1.1754944e-38, %v985
      %v987 = vsel %vm984, %v986, %v982
      %v988 = vmul.f32 %v896, %v987
      %v989 = vrcp.pop %v919
      %v990 = vmul.f32 %v919, %v989
      %v991 = vsub.f32 1.0, %v990
      %v992 = vmul.f32 %v989, %v991
      %v993 = vadd.f32 %v989, %v992
      %vm994 = vweird.f32 %v919
      %vm995 = vweird.f32 %v989
      %vm996 = vmor %vm994, %vm995
      %v997 = vsel %vm996, %v989, %v993
      %v998 = vand.u32 2147483647, %v919
      %vm999 = vcmp.eq.f32.partialorder %v998, 8.507059e+37
      %v1000 = vand.u32 %v919, 2147483648
      %v1001 = vor.u32 1.1754944e-38, %v1000
      %v1002 = vsel %vm999, %v1001, %v997
      %v1003 = vmul.f32 %v898, %v1002
      %v1004 = vrcp.pop %v922
      %v1005 = vmul.f32 %v922, %v1004
      %v1006 = vsub.f32 1.0, %v1005
      %v1007 = vmul.f32 %v1004, %v1006
      %v1008 = vadd.f32 %v1004, %v1007
      %vm1009 = vweird.f32 %v922
      %vm1010 = vweird.f32 %v1004
      %vm1011 = vmor %vm1009, %vm1010
      %v1012 = vsel %vm1011, %v1004, %v1008
      %v1013 = vand.u32 2147483647, %v922
      %vm1014 = vcmp.eq.f32.partialorder %v1013, 8.507059e+37
      %v1015 = vand.u32 %v922, 2147483648
      %v1016 = vor.u32 1.1754944e-38, %v1015
      %v1017 = vsel %vm1014, %v1016, %v1012
      %v1018 = vmul.f32 %v900, %v1017
      %v1019 = vrcp.pop %v925
      %v1020 = vmul.f32 %v925, %v1019
      %v1021 = vsub.f32 1.0, %v1020
      %v1022 = vmul.f32 %v1019, %v1021
      %v1023 = vadd.f32 %v1019, %v1022
      %vm1024 = vweird.f32 %v925
      %vm1025 = vweird.f32 %v1019
      %vm1026 = vmor %vm1024, %vm1025
      %v1027 = vsel %vm1026, %v1019, %v1023
      %v1028 = vand.u32 2147483647, %v925
      %vm1029 = vcmp.eq.f32.partialorder %v1028, 8.507059e+37
      %v1030 = vand.u32 %v925, 2147483648
      %v1031 = vor.u32 1.1754944e-38, %v1030
      %v1032 = vsel %vm1029, %v1031, %v1027
      %v1033 = vmul.f32 %v902, %v1032
      %v1034 = vrcp.pop %v928
      %v1035 = vmul.f32 %v928, %v1034
      %v1036 = vsub.f32 1.0, %v1035
      %v1037 = vmul.f32 %v1034, %v1036
      %v1038 = vadd.f32 %v1034, %v1037
      %vm1039 = vweird.f32 %v928
      %vm1040 = vweird.f32 %v1034
      %vm1041 = vmor %vm1039, %vm1040
      %v1042 = vsel %vm1041, %v1034, %v1038
      %v1043 = vand.u32 2147483647, %v928
      %vm1044 = vcmp.eq.f32.partialorder %v1043, 8.507059e+37
      %v1045 = vand.u32 %v928, 2147483648
      %v1046 = vor.u32 1.1754944e-38, %v1045
      %v1047 = vsel %vm1044, %v1046, %v1042
      %v1048 = vmul.f32 %v904, %v1047
      %1050 = vrot.lane.b32.xlu0 %v718, 96
      %v1051 = vpop.permute.xlu0 %1050
      %v1054 = vsel %vm719, %v943, 0
      %v1057 = vsel %vm719, %v958, 0
      %1059 = vmatpush.msra.mxu0 0.0
      %1060 = vmatpush.msra.mxu0 0.0
      %1061 = vmatpush.msra.mxu0 0.0
      %1062 = vmatpush.msra.mxu0 0.0
      %1063 = vmatpush.msra.mxu0 0.0
      %1064 = vmatpush.msra.mxu0 0.0
      %1065 = vmatpush.msra.mxu0 0.0
      %1066 = vmatpush.msra.mxu0 0.0
      %1067 = vmatpush.msra.mxu0 0.0
      %1068 = vmatpush.msra.mxu0 0.0
      %1069 = vmatpush.msra.mxu0 0.0
      %1070 = vmatpush.msra.mxu0 0.0
      %1071 = vmatpush.msra.mxu0 0.0
      %1072 = vmatpush.msra.mxu0 0.0
      %1073 = vmatpush.msra.mxu0 0.0
      %1074 = vmatpush.msra.mxu0 %v1051
      %1075 = vmatmul.f32.gmra.mxu0 %v1054
      %v1076 = vpop.f32.mrf.mxu0
      %v1077 = vadd.f32 0.0, %v1076
      %1078 = vmatmul.f32.gmra.mxu0 %v1057
      %v1079 = vpop.f32.mrf.mxu0
      %v1080 = vadd.f32 0.0, %v1079
      %1081 = vdwg.mxu0
      %1082 = vrot.lane.b32.xlu0 %v718, 88
      %v1083 = vpop.permute.xlu0 %1082
      %v1086 = vsel %vm719, %v973, 0
      %v1089 = vsel %vm719, %v988, 0
      %1091 = vmatpush.msra.mxu0 0.0
      %1092 = vmatpush.msra.mxu0 0.0
      %1093 = vmatpush.msra.mxu0 0.0
      %1094 = vmatpush.msra.mxu0 0.0
      %1095 = vmatpush.msra.mxu0 0.0
      %1096 = vmatpush.msra.mxu0 0.0
      %1097 = vmatpush.msra.mxu0 0.0
      %1098 = vmatpush.msra.mxu0 0.0
      %1099 = vmatpush.msra.mxu0 0.0
      %1100 = vmatpush.msra.mxu0 0.0
      %1101 = vmatpush.msra.mxu0 0.0
      %1102 = vmatpush.msra.mxu0 0.0
      %1103 = vmatpush.msra.mxu0 0.0
      %1104 = vmatpush.msra.mxu0 0.0
      %1105 = vmatpush.msra.mxu0 0.0
      %1106 = vmatpush.msra.mxu0 %v1083
      %1107 = vmatmul.f32.gmra.mxu0 %v1086
      %v1108 = vpop.f32.mrf.mxu0
      %v1109 = vadd.f32 0.0, %v1108
      %1110 = vmatmul.f32.gmra.mxu0 %v1089
      %v1111 = vpop.f32.mrf.mxu0
      %v1112 = vadd.f32 0.0, %v1111
      %1113 = vdwg.mxu0
      %1114 = vrot.lane.b32.xlu0 %v718, 80
      %v1115 = vpop.permute.xlu0 %1114
      %v1118 = vsel %vm719, %v1003, 0
      %v1121 = vsel %vm719, %v1018, 0
      %1123 = vmatpush.msra.mxu0 0.0
      %1124 = vmatpush.msra.mxu0 0.0
      %1125 = vmatpush.msra.mxu0 0.0
      %1126 = vmatpush.msra.mxu0 0.0
      %1127 = vmatpush.msra.mxu0 0.0
      %1128 = vmatpush.msra.mxu0 0.0
      %1129 = vmatpush.msra.mxu0 0.0
      %1130 = vmatpush.msra.mxu0 0.0
      %1131 = vmatpush.msra.mxu0 0.0
      %1132 = vmatpush.msra.mxu0 0.0
      %1133 = vmatpush.msra.mxu0 0.0
      %1134 = vmatpush.msra.mxu0 0.0
      %1135 = vmatpush.msra.mxu0 0.0
      %1136 = vmatpush.msra.mxu0 0.0
      %1137 = vmatpush.msra.mxu0 0.0
      %1138 = vmatpush.msra.mxu0 %v1115
      %1139 = vmatmul.f32.gmra.mxu0 %v1118
      %v1140 = vpop.f32.mrf.mxu0
      %v1141 = vadd.f32 0.0, %v1140
      %1142 = vmatmul.f32.gmra.mxu0 %v1121
      %v1143 = vpop.f32.mrf.mxu0
      %v1144 = vadd.f32 0.0, %v1143
      %1145 = vdwg.mxu0
      %1146 = vrot.lane.b32.xlu0 %v718, 72
      %v1147 = vpop.permute.xlu0 %1146
      %v1150 = vsel %vm719, %v1033, 0
      %v1153 = vsel %vm719, %v1048, 0
      %1155 = vmatpush.msra.mxu0 0.0
      %1156 = vmatpush.msra.mxu0 0.0
      %1157 = vmatpush.msra.mxu0 0.0
      %1158 = vmatpush.msra.mxu0 0.0
      %1159 = vmatpush.msra.mxu0 0.0
      %1160 = vmatpush.msra.mxu0 0.0
      %1161 = vmatpush.msra.mxu0 0.0
      %1162 = vmatpush.msra.mxu0 0.0
      %1163 = vmatpush.msra.mxu0 0.0
      %1164 = vmatpush.msra.mxu0 0.0
      %1165 = vmatpush.msra.mxu0 0.0
      %1166 = vmatpush.msra.mxu0 0.0
      %1167 = vmatpush.msra.mxu0 0.0
      %1168 = vmatpush.msra.mxu0 0.0
      %1169 = vmatpush.msra.mxu0 0.0
      %1170 = vmatpush.msra.mxu0 %v1147
      %1171 = vmatmul.f32.gmra.mxu0 %v1150
      %v1172 = vpop.f32.mrf.mxu0
      %v1173 = vadd.f32 0.0, %v1172
      %1174 = vmatmul.f32.gmra.mxu0 %v1153
      %v1175 = vpop.f32.mrf.mxu0
      %v1176 = vadd.f32 0.0, %v1175
      %1177 = vdwg.mxu0
      %1180 = vrot.lane.b32.xlu0 %v1109, 8
      %v1181 = vpop.permute.xlu0 %1180
      %1182 = vrot.lane.b32.xlu0 %v1112, 8
      %v1183 = vpop.permute.xlu0 %1182
      %1188 = vrot.lane.b32.xlu0 %v1141, 16
      %v1189 = vpop.permute.xlu0 %1188
      %1190 = vrot.lane.b32.xlu0 %v1144, 16
      %v1191 = vpop.permute.xlu0 %1190
      %1196 = vrot.lane.b32.xlu0 %v1173, 24
      %v1197 = vpop.permute.xlu0 %1196
      %1198 = vrot.lane.b32.xlu0 %v1176, 24
      %v1199 = vpop.permute.xlu0 %1198
      %v1202 = vsel %vm719, %v1077, %v1181
      %v1203 = vsel %vm719, %v1080, %v1183
      %vm1204 = vcmask 130048
      %v1205 = vsel %vm1204, %v1202, %v1189
      %v1206 = vsel %vm1204, %v1203, %v1191
      %vm1207 = vcmask 195584
      %v1208 = vsel %vm1207, %v1205, %v1197
      %v1209 = vsel %vm1207, %v1206, %v1199
      %v1210 = vld [vmem:[%s5] sm:$0xff]
      %v1211 = vld [vmem:[%s5 + $0x8] sm:$0xff]
      %v1212 = vld [vmem:[%s5 + $0x10] sm:$0xff]
      %v1213 = vld [vmem:[%s5 + $0x18] sm:$0xff]
      %v1214 = vperm.slane %v648, 3
      %v1216 = vsel %vm654, %v1208, 0
      %v1219 = vsel %vm654, %v1209, 0
      %1221 = vmatpush.msra.mxu0 0.0
      %1222 = vmatpush.msra.mxu0 0.0
      %1223 = vmatpush.msra.mxu0 0.0
      %1224 = vmatpush.msra.mxu0 0.0
      %1225 = vmatpush.msra.mxu0 0.0
      %1226 = vmatpush.msra.mxu0 0.0
      %1227 = vmatpush.msra.mxu0 0.0
      %1228 = vmatpush.msra.mxu0 0.0
      %1229 = vmatpush.msra.mxu0 0.0
      %1230 = vmatpush.msra.mxu0 0.0
      %1231 = vmatpush.msra.mxu0 0.0
      %1232 = vmatpush.msra.mxu0 0.0
      %1233 = vmatpush.msra.mxu0 %v1213
      %1234 = vmatpush.msra.mxu0 %v1212
      %1235 = vmatpush.msra.mxu0 %v1211
      %1236 = vmatpush.msra.mxu0 %v1210
      %1237 = vmatmul.f32.gmra.mxu0 %v1216
      %v1238 = vpop.f32.mrf.mxu0
      %v1239 = vadd.f32 %v1214, %v1238
      %1240 = vmatmul.f32.gmra.mxu0 %v1219
      %v1241 = vpop.f32.mrf.mxu0
      %v1242 = vadd.f32 %v1214, %v1241
      %1243 = vdwg.mxu0
      %v1244 = vadd.f32 %v644, %v1239
      %v1245 = vadd.f32 %v645, %v1242
      %v1246 = vld [vmem:[%s11] sm:$0x3]
      %v1247 = vsel %vm654, %v1244, 0.0
      %1248 = vadd.xlane.f32.xlu0 %v1247
      %v1249 = vpop.xlane.xlu0 %1248
      %v1250 = vsel %vm654, %v1245, 0.0
      %1251 = vadd.xlane.f32.xlu0 %v1250
      %v1252 = vpop.xlane.xlu0 %1251
      %v1253 = vrcp.pop 32.0
      %v1254 = vmul.f32 32.0, %v1253
      %v1255 = vsub.f32 1.0, %v1254
      %v1256 = vmul.f32 %v1253, %v1255
      %v1257 = vadd.f32 %v1253, %v1256
      %vm1258 = vweird.f32 %v1253
      %v1259 = vsel %vm1258, %v1253, %v1257
      %v1260 = vmul.f32 %v1249, %v1259
      %v1261 = vmul.f32 %v1252, %v1259
      %v1262 = vsub.f32 %v1244, %v1260
      %v1263 = vsub.f32 %v1245, %v1261
      %v1264 = vmul.f32 %v1262, %v1262
      %v1265 = vmul.f32 %v1263, %v1263
      %v1266 = vsel %vm654, %v1264, 0.0
      %1267 = vadd.xlane.f32.xlu0 %v1266
      %v1268 = vpop.xlane.xlu0 %1267
      %v1269 = vsel %vm654, %v1265, 0.0
      %1270 = vadd.xlane.f32.xlu0 %v1269
      %v1271 = vpop.xlane.xlu0 %1270
      %v1272 = vmul.f32 %v1268, %v1259
      %v1273 = vmul.f32 %v1271, %v1259
      %v1274 = vadd.f32 %v1272, 1e-05
      %v1275 = vadd.f32 %v1273, 1e-05
      %v1276 = vrsqrt.pop %v1274
      %v1277 = vmul.f32 %v1276, %v1274
      %v1278 = vmul.f32 %v1277, %v1276
      %v1279 = vmul.f32 0.5, %v1278
      %v1280 = vsub.f32 1.5, %v1279
      %v1281 = vmul.f32 %v1276, %v1280
      %vm1282 = vweird.f32 %v1274
      %vm1283 = vweird.f32 %v1276
      %vm1284 = vmor %vm1282, %vm1283
      %v1285 = vsel %vm1284, %v1276, %v1281
      %v1286 = vrsqrt.pop %v1275
      %v1287 = vmul.f32 %v1286, %v1275
      %v1288 = vmul.f32 %v1287, %v1286
      %v1289 = vmul.f32 0.5, %v1288
      %v1290 = vsub.f32 1.5, %v1289
      %v1291 = vmul.f32 %v1286, %v1290
      %vm1292 = vweird.f32 %v1275
      %vm1293 = vweird.f32 %v1286
      %vm1294 = vmor %vm1292, %vm1293
      %v1295 = vsel %vm1294, %v1286, %v1291
      %v1296 = vmul.f32 %v1262, %v1285
      %v1297 = vmul.f32 %v1263, %v1295
      %v1298 = vperm.slane %v1246, 0
      %v1299 = vmul.f32 %v1296, %v1298
      %v1300 = vmul.f32 %v1297, %v1298
      %v1301 = vperm.slane %v1246, 1
      %v1302 = vadd.f32 %v1299, %v1301
      %v1303 = vadd.f32 %v1300, %v1301
      %v1304 = vld [vmem:[%s10] sm:$0xf]
      %v1305 = vld [vmem:[%s7] sm:$0xff]
      %v1306 = vld [vmem:[%s7 + $0x8] sm:$0xff]
      %v1307 = vld [vmem:[%s7 + $0x10] sm:$0xff]
      %v1308 = vld [vmem:[%s7 + $0x18] sm:$0xff]
      %v1309 = vperm.slane %v1304, 0
      %v1311 = vsel %vm654, %v1302, 0
      %v1314 = vsel %vm654, %v1303, 0
      %1316 = vmatpush.msra.mxu0 0.0
      %1317 = vmatpush.msra.mxu0 0.0
      %1318 = vmatpush.msra.mxu0 0.0
      %1319 = vmatpush.msra.mxu0 0.0
      %1320 = vmatpush.msra.mxu0 0.0
      %1321 = vmatpush.msra.mxu0 0.0
      %1322 = vmatpush.msra.mxu0 0.0
      %1323 = vmatpush.msra.mxu0 0.0
      %1324 = vmatpush.msra.mxu0 0.0
      %1325 = vmatpush.msra.mxu0 0.0
      %1326 = vmatpush.msra.mxu0 0.0
      %1327 = vmatpush.msra.mxu0 0.0
      %1328 = vmatpush.msra.mxu0 %v1308
      %1329 = vmatpush.msra.mxu0 %v1307
      %1330 = vmatpush.msra.mxu0 %v1306
      %1331 = vmatpush.msra.mxu0 %v1305
      %1332 = vmatmul.f32.gmra.mxu0 %v1311
      %v1333 = vpop.f32.mrf.mxu0
      %v1334 = vadd.f32 %v1309, %v1333
      %1335 = vmatmul.f32.gmra.mxu0 %v1314
      %v1336 = vpop.f32.mrf.mxu0
      %v1337 = vadd.f32 %v1309, %v1336
      %1338 = vdwg.mxu0
      %v1339 = vld [vmem:[%s8] sm:$0xff]
      %v1340 = vld [vmem:[%s8 + $0x8] sm:$0xff]
      %v1341 = vld [vmem:[%s8 + $0x10] sm:$0xff]
      %v1342 = vld [vmem:[%s8 + $0x18] sm:$0xff]
      %v1344 = vsel %vm654, %v647, 0
      %1346 = vmatpush.msra.mxu0 0.0
      %1347 = vmatpush.msra.mxu0 0.0
      %1348 = vmatpush.msra.mxu0 0.0
      %1349 = vmatpush.msra.mxu0 0.0
      %1350 = vmatpush.msra.mxu0 0.0
      %1351 = vmatpush.msra.mxu0 0.0
      %1352 = vmatpush.msra.mxu0 0.0
      %1353 = vmatpush.msra.mxu0 0.0
      %1354 = vmatpush.msra.mxu0 0.0
      %1355 = vmatpush.msra.mxu0 0.0
      %1356 = vmatpush.msra.mxu0 0.0
      %1357 = vmatpush.msra.mxu0 0.0
      %1358 = vmatpush.msra.mxu0 %v1342
      %1359 = vmatpush.msra.mxu0 %v1341
      %1360 = vmatpush.msra.mxu0 %v1340
      %1361 = vmatpush.msra.mxu0 %v1339
      %1362 = vmatmul.f32.gmra.mxu0 %v1344
      %v1363 = vpop.f32.mrf.mxu0
      %v1364 = vadd.f32 0.0, %v1363
      %1365 = vdwg.mxu0
      %v1366 = vperm.slane %v1304, 1
      %v1367 = vadd.f32 %v1364, %v1366
      %v1368 = vperm.slane %v1304, 2
      %1370 = vrot.lane.b32.xlu0 %v1368, 32
      %v1371 = vpop.permute.xlu0 %1370
      %v1373 = vadd.f32 %v1364, %v1371
      %v1375 = vsel %vm719, %v1334, 0
      %v1378 = vsel %vm719, %v1337, 0
      %v1381 = vsel %vm719, %v1367, 0
      %1383 = vmatpush.xpose.msra.mxu0 0.0
      %1384 = vmatpush.xpose.msra.mxu0 0.0
      %1385 = vmatpush.xpose.msra.mxu0 0.0
      %1386 = vmatpush.xpose.msra.mxu0 0.0
      %1387 = vmatpush.xpose.msra.mxu0 0.0
      %1388 = vmatpush.xpose.msra.mxu0 0.0
      %1389 = vmatpush.xpose.msra.mxu0 0.0
      %1390 = vmatpush.xpose.msra.mxu0 0.0
      %1391 = vmatpush.xpose.msra.mxu0 0.0
      %1392 = vmatpush.xpose.msra.mxu0 0.0
      %1393 = vmatpush.xpose.msra.mxu0 0.0
      %1394 = vmatpush.xpose.msra.mxu0 0.0
      %1395 = vmatpush.xpose.msra.mxu0 0.0
      %1396 = vmatpush.xpose.msra.mxu0 0.0
      %1397 = vmatpush.xpose.msra.mxu0 0.0
      %1398 = vmatpush.xpose.msra.mxu0 %v1381
      %1399 = vmatmul.f32.gmra.mxu0 %v1375
      %v1400 = vpop.f32.mrf.mxu0
      %v1401 = vadd.f32 0.0, %v1400
      %1402 = vmatmul.f32.gmra.mxu0 %v1378
      %v1403 = vpop.f32.mrf.mxu0
      %v1404 = vadd.f32 0.0, %v1403
      %1405 = vdwg.mxu0
      %1406 = vrot.lane.b32.xlu0 %v1334, 120
      %v1407 = vpop.permute.xlu0 %1406
      %1408 = vrot.lane.b32.xlu0 %v1337, 120
      %v1409 = vpop.permute.xlu0 %1408
      %1410 = vrot.lane.b32.xlu0 %v1367, 120
      %v1411 = vpop.permute.xlu0 %1410
      %v1412 = vsel %vm719, %v1407, 0
      %v1414 = vsel %vm719, %v1409, 0
      %v1416 = vsel %vm719, %v1411, 0
      %1418 = vmatpush.xpose.msra.mxu0 0.0
      %1419 = vmatpush.xpose.msra.mxu0 0.0
      %1420 = vmatpush.xpose.msra.mxu0 0.0
      %1421 = vmatpush.xpose.msra.mxu0 0.0
      %1422 = vmatpush.xpose.msra.mxu0 0.0
      %1423 = vmatpush.xpose.msra.mxu0 0.0
      %1424 = vmatpush.xpose.msra.mxu0 0.0
      %1425 = vmatpush.xpose.msra.mxu0 0.0
      %1426 = vmatpush.xpose.msra.mxu0 0.0
      %1427 = vmatpush.xpose.msra.mxu0 0.0
      %1428 = vmatpush.xpose.msra.mxu0 0.0
      %1429 = vmatpush.xpose.msra.mxu0 0.0
      %1430 = vmatpush.xpose.msra.mxu0 0.0
      %1431 = vmatpush.xpose.msra.mxu0 0.0
      %1432 = vmatpush.xpose.msra.mxu0 0.0
      %1433 = vmatpush.xpose.msra.mxu0 %v1416
      %1434 = vmatmul.f32.gmra.mxu0 %v1412
      %v1435 = vpop.f32.mrf.mxu0
      %v1436 = vadd.f32 0.0, %v1435
      %1437 = vmatmul.f32.gmra.mxu0 %v1414
      %v1438 = vpop.f32.mrf.mxu0
      %v1439 = vadd.f32 0.0, %v1438
      %1440 = vdwg.mxu0
      %1441 = vrot.lane.b32.xlu0 %v1334, 112
      %v1442 = vpop.permute.xlu0 %1441
      %1443 = vrot.lane.b32.xlu0 %v1337, 112
      %v1444 = vpop.permute.xlu0 %1443
      %1445 = vrot.lane.b32.xlu0 %v1367, 112
      %v1446 = vpop.permute.xlu0 %1445
      %v1447 = vsel %vm719, %v1442, 0
      %v1449 = vsel %vm719, %v1444, 0
      %v1451 = vsel %vm719, %v1446, 0
      %1453 = vmatpush.xpose.msra.mxu0 0.0
      %1454 = vmatpush.xpose.msra.mxu0 0.0
      %1455 = vmatpush.xpose.msra.mxu0 0.0
      %1456 = vmatpush.xpose.msra.mxu0 0.0
      %1457 = vmatpush.xpose.msra.mxu0 0.0
      %1458 = vmatpush.xpose.msra.mxu0 0.0
      %1459 = vmatpush.xpose.msra.mxu0 0.0
      %1460 = vmatpush.xpose.msra.mxu0 0.0
      %1461 = vmatpush.xpose.msra.mxu0 0.0
      %1462 = vmatpush.xpose.msra.mxu0 0.0
      %1463 = vmatpush.xpose.msra.mxu0 0.0
      %1464 = vmatpush.xpose.msra.mxu0 0.0
      %1465 = vmatpush.xpose.msra.mxu0 0.0
      %1466 = vmatpush.xpose.msra.mxu0 0.0
      %1467 = vmatpush.xpose.msra.mxu0 0.0
      %1468 = vmatpush.xpose.msra.mxu0 %v1451
      %1469 = vmatmul.f32.gmra.mxu0 %v1447
      %v1470 = vpop.f32.mrf.mxu0
      %v1471 = vadd.f32 0.0, %v1470
      %1472 = vmatmul.f32.gmra.mxu0 %v1449
      %v1473 = vpop.f32.mrf.mxu0
      %v1474 = vadd.f32 0.0, %v1473
      %1475 = vdwg.mxu0
      %1476 = vrot.lane.b32.xlu0 %v1334, 104
      %v1477 = vpop.permute.xlu0 %1476
      %1478 = vrot.lane.b32.xlu0 %v1337, 104
      %v1479 = vpop.permute.xlu0 %1478
      %1480 = vrot.lane.b32.xlu0 %v1367, 104
      %v1481 = vpop.permute.xlu0 %1480
      %v1482 = vsel %vm719, %v1477, 0
      %v1484 = vsel %vm719, %v1479, 0
      %v1486 = vsel %vm719, %v1481, 0
      %1488 = vmatpush.xpose.msra.mxu0 0.0
      %1489 = vmatpush.xpose.msra.mxu0 0.0
      %1490 = vmatpush.xpose.msra.mxu0 0.0
      %1491 = vmatpush.xpose.msra.mxu0 0.0
      %1492 = vmatpush.xpose.msra.mxu0 0.0
      %1493 = vmatpush.xpose.msra.mxu0 0.0
      %1494 = vmatpush.xpose.msra.mxu0 0.0
      %1495 = vmatpush.xpose.msra.mxu0 0.0
      %1496 = vmatpush.xpose.msra.mxu0 0.0
      %1497 = vmatpush.xpose.msra.mxu0 0.0
      %1498 = vmatpush.xpose.msra.mxu0 0.0
      %1499 = vmatpush.xpose.msra.mxu0 0.0
      %1500 = vmatpush.xpose.msra.mxu0 0.0
      %1501 = vmatpush.xpose.msra.mxu0 0.0
      %1502 = vmatpush.xpose.msra.mxu0 0.0
      %1503 = vmatpush.xpose.msra.mxu0 %v1486
      %1504 = vmatmul.f32.gmra.mxu0 %v1482
      %v1505 = vpop.f32.mrf.mxu0
      %v1506 = vadd.f32 0.0, %v1505
      %1507 = vmatmul.f32.gmra.mxu0 %v1484
      %v1508 = vpop.f32.mrf.mxu0
      %v1509 = vadd.f32 0.0, %v1508
      %1510 = vdwg.mxu0
      %v1511 = vsel %vm719, %v1401, -inf
      %1512 = vmax.xlane.f32.xlu0 %v1511
      %v1513 = vpop.xlane.xlu0 %1512
      %v1514 = vsel %vm719, %v1404, -inf
      %1515 = vmax.xlane.f32.xlu0 %v1514
      %v1516 = vpop.xlane.xlu0 %1515
      %v1517 = vsel %vm719, %v1436, -inf
      %1518 = vmax.xlane.f32.xlu0 %v1517
      %v1519 = vpop.xlane.xlu0 %1518
      %v1520 = vsel %vm719, %v1439, -inf
      %1521 = vmax.xlane.f32.xlu0 %v1520
      %v1522 = vpop.xlane.xlu0 %1521
      %v1523 = vsel %vm719, %v1471, -inf
      %1524 = vmax.xlane.f32.xlu0 %v1523
      %v1525 = vpop.xlane.xlu0 %1524
      %v1526 = vsel %vm719, %v1474, -inf
      %1527 = vmax.xlane.f32.xlu0 %v1526
      %v1528 = vpop.xlane.xlu0 %1527
      %v1529 = vsel %vm719, %v1506, -inf
      %1530 = vmax.xlane.f32.xlu0 %v1529
      %v1531 = vpop.xlane.xlu0 %1530
      %v1532 = vsel %vm719, %v1509, -inf
      %1533 = vmax.xlane.f32.xlu0 %v1532
      %v1534 = vpop.xlane.xlu0 %1533
      %v1535 = vsub.f32 %v1401, %v1513
      %v1536 = vsub.f32 %v1404, %v1516
      %v1537 = vsub.f32 %v1436, %v1519
      %v1538 = vsub.f32 %v1439, %v1522
      %v1539 = vsub.f32 %v1471, %v1525
      %v1540 = vsub.f32 %v1474, %v1528
      %v1541 = vsub.f32 %v1506, %v1531
      %v1542 = vsub.f32 %v1509, %v1534
      %v1543 = vmul.f32 %v1535, 1.442695
      %v1544 = vpow.pop %v1543
      %v1545 = vmul.f32 %v1536, 1.442695
      %v1546 = vpow.pop %v1545
      %v1547 = vmul.f32 %v1537, 1.442695
      %v1548 = vpow.pop %v1547
      %v1549 = vmul.f32 %v1538, 1.442695
      %v1550 = vpow.pop %v1549
      %v1551 = vmul.f32 %v1539, 1.442695
      %v1552 = vpow.pop %v1551
      %v1553 = vmul.f32 %v1540, 1.442695
      %v1554 = vpow.pop %v1553
      %v1555 = vmul.f32 %v1541, 1.442695
      %v1556 = vpow.pop %v1555
      %v1557 = vmul.f32 %v1542, 1.442695
      %v1558 = vpow.pop %v1557
      %v1559 = vsel %vm719, %v1544, 0.0
      %1560 = vadd.xlane.f32.xlu0 %v1559
      %v1561 = vpop.xlane.xlu0 %1560
      %v1562 = vsel %vm719, %v1546, 0.0
      %1563 = vadd.xlane.f32.xlu0 %v1562
      %v1564 = vpop.xlane.xlu0 %1563
      %v1565 = vsel %vm719, %v1548, 0.0
      %1566 = vadd.xlane.f32.xlu0 %v1565
      %v1567 = vpop.xlane.xlu0 %1566
      %v1568 = vsel %vm719, %v1550, 0.0
      %1569 = vadd.xlane.f32.xlu0 %v1568
      %v1570 = vpop.xlane.xlu0 %1569
      %v1571 = vsel %vm719, %v1552, 0.0
      %1572 = vadd.xlane.f32.xlu0 %v1571
      %v1573 = vpop.xlane.xlu0 %1572
      %v1574 = vsel %vm719, %v1554, 0.0
      %1575 = vadd.xlane.f32.xlu0 %v1574
      %v1576 = vpop.xlane.xlu0 %1575
      %v1577 = vsel %vm719, %v1556, 0.0
      %1578 = vadd.xlane.f32.xlu0 %v1577
      %v1579 = vpop.xlane.xlu0 %1578
      %v1580 = vsel %vm719, %v1558, 0.0
      %1581 = vadd.xlane.f32.xlu0 %v1580
      %v1582 = vpop.xlane.xlu0 %1581
      %v1583 = vrcp.pop %v1561
      %v1584 = vmul.f32 %v1561, %v1583
      %v1585 = vsub.f32 1.0, %v1584
      %v1586 = vmul.f32 %v1583, %v1585
      %v1587 = vadd.f32 %v1583, %v1586
      %vm1588 = vweird.f32 %v1561
      %vm1589 = vweird.f32 %v1583
      %vm1590 = vmor %vm1588, %vm1589
      %v1591 = vsel %vm1590, %v1583, %v1587
      %v1592 = vand.u32 2147483647, %v1561
      %vm1593 = vcmp.eq.f32.partialorder %v1592, 8.507059e+37
      %v1594 = vand.u32 %v1561, 2147483648
      %v1595 = vor.u32 1.1754944e-38, %v1594
      %v1596 = vsel %vm1593, %v1595, %v1591
      %v1597 = vmul.f32 %v1544, %v1596
      %v1598 = vrcp.pop %v1564
      %v1599 = vmul.f32 %v1564, %v1598
      %v1600 = vsub.f32 1.0, %v1599
      %v1601 = vmul.f32 %v1598, %v1600
      %v1602 = vadd.f32 %v1598, %v1601
      %vm1603 = vweird.f32 %v1564
      %vm1604 = vweird.f32 %v1598
      %vm1605 = vmor %vm1603, %vm1604
      %v1606 = vsel %vm1605, %v1598, %v1602
      %v1607 = vand.u32 2147483647, %v1564
      %vm1608 = vcmp.eq.f32.partialorder %v1607, 8.507059e+37
      %v1609 = vand.u32 %v1564, 2147483648
      %v1610 = vor.u32 1.1754944e-38, %v1609
      %v1611 = vsel %vm1608, %v1610, %v1606
      %v1612 = vmul.f32 %v1546, %v1611
      %v1613 = vrcp.pop %v1567
      %v1614 = vmul.f32 %v1567, %v1613
      %v1615 = vsub.f32 1.0, %v1614
      %v1616 = vmul.f32 %v1613, %v1615
      %v1617 = vadd.f32 %v1613, %v1616
      %vm1618 = vweird.f32 %v1567
      %vm1619 = vweird.f32 %v1613
      %vm1620 = vmor %vm1618, %vm1619
      %v1621 = vsel %vm1620, %v1613, %v1617
      %v1622 = vand.u32 2147483647, %v1567
      %vm1623 = vcmp.eq.f32.partialorder %v1622, 8.507059e+37
      %v1624 = vand.u32 %v1567, 2147483648
      %v1625 = vor.u32 1.1754944e-38, %v1624
      %v1626 = vsel %vm1623, %v1625, %v1621
      %v1627 = vmul.f32 %v1548, %v1626
      %v1628 = vrcp.pop %v1570
      %v1629 = vmul.f32 %v1570, %v1628
      %v1630 = vsub.f32 1.0, %v1629
      %v1631 = vmul.f32 %v1628, %v1630
      %v1632 = vadd.f32 %v1628, %v1631
      %vm1633 = vweird.f32 %v1570
      %vm1634 = vweird.f32 %v1628
      %vm1635 = vmor %vm1633, %vm1634
      %v1636 = vsel %vm1635, %v1628, %v1632
      %v1637 = vand.u32 2147483647, %v1570
      %vm1638 = vcmp.eq.f32.partialorder %v1637, 8.507059e+37
      %v1639 = vand.u32 %v1570, 2147483648
      %v1640 = vor.u32 1.1754944e-38, %v1639
      %v1641 = vsel %vm1638, %v1640, %v1636
      %v1642 = vmul.f32 %v1550, %v1641
      %v1643 = vrcp.pop %v1573
      %v1644 = vmul.f32 %v1573, %v1643
      %v1645 = vsub.f32 1.0, %v1644
      %v1646 = vmul.f32 %v1643, %v1645
      %v1647 = vadd.f32 %v1643, %v1646
      %vm1648 = vweird.f32 %v1573
      %vm1649 = vweird.f32 %v1643
      %vm1650 = vmor %vm1648, %vm1649
      %v1651 = vsel %vm1650, %v1643, %v1647
      %v1652 = vand.u32 2147483647, %v1573
      %vm1653 = vcmp.eq.f32.partialorder %v1652, 8.507059e+37
      %v1654 = vand.u32 %v1573, 2147483648
      %v1655 = vor.u32 1.1754944e-38, %v1654
      %v1656 = vsel %vm1653, %v1655, %v1651
      %v1657 = vmul.f32 %v1552, %v1656
      %v1658 = vrcp.pop %v1576
      %v1659 = vmul.f32 %v1576, %v1658
      %v1660 = vsub.f32 1.0, %v1659
      %v1661 = vmul.f32 %v1658, %v1660
      %v1662 = vadd.f32 %v1658, %v1661
      %vm1663 = vweird.f32 %v1576
      %vm1664 = vweird.f32 %v1658
      %vm1665 = vmor %vm1663, %vm1664
      %v1666 = vsel %vm1665, %v1658, %v1662
      %v1667 = vand.u32 2147483647, %v1576
      %vm1668 = vcmp.eq.f32.partialorder %v1667, 8.507059e+37
      %v1669 = vand.u32 %v1576, 2147483648
      %v1670 = vor.u32 1.1754944e-38, %v1669
      %v1671 = vsel %vm1668, %v1670, %v1666
      %v1672 = vmul.f32 %v1554, %v1671
      %v1673 = vrcp.pop %v1579
      %v1674 = vmul.f32 %v1579, %v1673
      %v1675 = vsub.f32 1.0, %v1674
      %v1676 = vmul.f32 %v1673, %v1675
      %v1677 = vadd.f32 %v1673, %v1676
      %vm1678 = vweird.f32 %v1579
      %vm1679 = vweird.f32 %v1673
      %vm1680 = vmor %vm1678, %vm1679
      %v1681 = vsel %vm1680, %v1673, %v1677
      %v1682 = vand.u32 2147483647, %v1579
      %vm1683 = vcmp.eq.f32.partialorder %v1682, 8.507059e+37
      %v1684 = vand.u32 %v1579, 2147483648
      %v1685 = vor.u32 1.1754944e-38, %v1684
      %v1686 = vsel %vm1683, %v1685, %v1681
      %v1687 = vmul.f32 %v1556, %v1686
      %v1688 = vrcp.pop %v1582
      %v1689 = vmul.f32 %v1582, %v1688
      %v1690 = vsub.f32 1.0, %v1689
      %v1691 = vmul.f32 %v1688, %v1690
      %v1692 = vadd.f32 %v1688, %v1691
      %vm1693 = vweird.f32 %v1582
      %vm1694 = vweird.f32 %v1688
      %vm1695 = vmor %vm1693, %vm1694
      %v1696 = vsel %vm1695, %v1688, %v1692
      %v1697 = vand.u32 2147483647, %v1582
      %vm1698 = vcmp.eq.f32.partialorder %v1697, 8.507059e+37
      %v1699 = vand.u32 %v1582, 2147483648
      %v1700 = vor.u32 1.1754944e-38, %v1699
      %v1701 = vsel %vm1698, %v1700, %v1696
      %v1702 = vmul.f32 %v1558, %v1701
      %1704 = vrot.lane.b32.xlu0 %v1373, 96
      %v1705 = vpop.permute.xlu0 %1704
      %v1708 = vsel %vm719, %v1597, 0
      %v1711 = vsel %vm719, %v1612, 0
      %1713 = vmatpush.msra.mxu0 0.0
      %1714 = vmatpush.msra.mxu0 0.0
      %1715 = vmatpush.msra.mxu0 0.0
      %1716 = vmatpush.msra.mxu0 0.0
      %1717 = vmatpush.msra.mxu0 0.0
      %1718 = vmatpush.msra.mxu0 0.0
      %1719 = vmatpush.msra.mxu0 0.0
      %1720 = vmatpush.msra.mxu0 0.0
      %1721 = vmatpush.msra.mxu0 0.0
      %1722 = vmatpush.msra.mxu0 0.0
      %1723 = vmatpush.msra.mxu0 0.0
      %1724 = vmatpush.msra.mxu0 0.0
      %1725 = vmatpush.msra.mxu0 0.0
      %1726 = vmatpush.msra.mxu0 0.0
      %1727 = vmatpush.msra.mxu0 0.0
      %1728 = vmatpush.msra.mxu0 %v1705
      %1729 = vmatmul.f32.gmra.mxu0 %v1708
      %v1730 = vpop.f32.mrf.mxu0
      %v1731 = vadd.f32 0.0, %v1730
      %1732 = vmatmul.f32.gmra.mxu0 %v1711
      %v1733 = vpop.f32.mrf.mxu0
      %v1734 = vadd.f32 0.0, %v1733
      %1735 = vdwg.mxu0
      %1736 = vrot.lane.b32.xlu0 %v1373, 88
      %v1737 = vpop.permute.xlu0 %1736
      %v1740 = vsel %vm719, %v1627, 0
      %v1743 = vsel %vm719, %v1642, 0
      %1745 = vmatpush.msra.mxu0 0.0
      %1746 = vmatpush.msra.mxu0 0.0
      %1747 = vmatpush.msra.mxu0 0.0
      %1748 = vmatpush.msra.mxu0 0.0
      %1749 = vmatpush.msra.mxu0 0.0
      %1750 = vmatpush.msra.mxu0 0.0
      %1751 = vmatpush.msra.mxu0 0.0
      %1752 = vmatpush.msra.mxu0 0.0
      %1753 = vmatpush.msra.mxu0 0.0
      %1754 = vmatpush.msra.mxu0 0.0
      %1755 = vmatpush.msra.mxu0 0.0
      %1756 = vmatpush.msra.mxu0 0.0
      %1757 = vmatpush.msra.mxu0 0.0
      %1758 = vmatpush.msra.mxu0 0.0
      %1759 = vmatpush.msra.mxu0 0.0
      %1760 = vmatpush.msra.mxu0 %v1737
      %1761 = vmatmul.f32.gmra.mxu0 %v1740
      %v1762 = vpop.f32.mrf.mxu0
      %v1763 = vadd.f32 0.0, %v1762
      %1764 = vmatmul.f32.gmra.mxu0 %v1743
      %v1765 = vpop.f32.mrf.mxu0
      %v1766 = vadd.f32 0.0, %v1765
      %1767 = vdwg.mxu0
      %1768 = vrot.lane.b32.xlu0 %v1373, 80
      %v1769 = vpop.permute.xlu0 %1768
      %v1772 = vsel %vm719, %v1657, 0
      %v1775 = vsel %vm719, %v1672, 0
      %1777 = vmatpush.msra.mxu0 0.0
      %1778 = vmatpush.msra.mxu0 0.0
      %1779 = vmatpush.msra.mxu0 0.0
      %1780 = vmatpush.msra.mxu0 0.0
      %1781 = vmatpush.msra.mxu0 0.0
      %1782 = vmatpush.msra.mxu0 0.0
      %1783 = vmatpush.msra.mxu0 0.0
      %1784 = vmatpush.msra.mxu0 0.0
      %1785 = vmatpush.msra.mxu0 0.0
      %1786 = vmatpush.msra.mxu0 0.0
      %1787 = vmatpush.msra.mxu0 0.0
      %1788 = vmatpush.msra.mxu0 0.0
      %1789 = vmatpush.msra.mxu0 0.0
      %1790 = vmatpush.msra.mxu0 0.0
      %1791 = vmatpush.msra.mxu0 0.0
      %1792 = vmatpush.msra.mxu0 %v1769
      %1793 = vmatmul.f32.gmra.mxu0 %v1772
      %v1794 = vpop.f32.mrf.mxu0
      %v1795 = vadd.f32 0.0, %v1794
      %1796 = vmatmul.f32.gmra.mxu0 %v1775
      %v1797 = vpop.f32.mrf.mxu0
      %v1798 = vadd.f32 0.0, %v1797
      %1799 = vdwg.mxu0
      %1800 = vrot.lane.b32.xlu0 %v1373, 72
      %v1801 = vpop.permute.xlu0 %1800
      %v1804 = vsel %vm719, %v1687, 0
      %v1807 = vsel %vm719, %v1702, 0
      %1809 = vmatpush.msra.mxu0 0.0
      %1810 = vmatpush.msra.mxu0 0.0
      %1811 = vmatpush.msra.mxu0 0.0
      %1812 = vmatpush.msra.mxu0 0.0
      %1813 = vmatpush.msra.mxu0 0.0
      %1814 = vmatpush.msra.mxu0 0.0
      %1815 = vmatpush.msra.mxu0 0.0
      %1816 = vmatpush.msra.mxu0 0.0
      %1817 = vmatpush.msra.mxu0 0.0
      %1818 = vmatpush.msra.mxu0 0.0
      %1819 = vmatpush.msra.mxu0 0.0
      %1820 = vmatpush.msra.mxu0 0.0
      %1821 = vmatpush.msra.mxu0 0.0
      %1822 = vmatpush.msra.mxu0 0.0
      %1823 = vmatpush.msra.mxu0 0.0
      %1824 = vmatpush.msra.mxu0 %v1801
      %1825 = vmatmul.f32.gmra.mxu0 %v1804
      %v1826 = vpop.f32.mrf.mxu0
      %v1827 = vadd.f32 0.0, %v1826
      %1828 = vmatmul.f32.gmra.mxu0 %v1807
      %v1829 = vpop.f32.mrf.mxu0
      %v1830 = vadd.f32 0.0, %v1829
      %1831 = vdwg.mxu0
      %1834 = vrot.lane.b32.xlu0 %v1763, 8
      %v1835 = vpop.permute.xlu0 %1834
      %1836 = vrot.lane.b32.xlu0 %v1766, 8
      %v1837 = vpop.permute.xlu0 %1836
      %1842 = vrot.lane.b32.xlu0 %v1795, 16
      %v1843 = vpop.permute.xlu0 %1842
      %1844 = vrot.lane.b32.xlu0 %v1798, 16
      %v1845 = vpop.permute.xlu0 %1844
      %1850 = vrot.lane.b32.xlu0 %v1827, 24
      %v1851 = vpop.permute.xlu0 %1850
      %1852 = vrot.lane.b32.xlu0 %v1830, 24
      %v1853 = vpop.permute.xlu0 %1852
      %v1856 = vsel %vm719, %v1731, %v1835
      %v1857 = vsel %vm719, %v1734, %v1837
      %v1858 = vsel %vm1204, %v1856, %v1843
      %v1859 = vsel %vm1204, %v1857, %v1845
      %v1860 = vsel %vm1207, %v1858, %v1851
      %v1861 = vsel %vm1207, %v1859, %v1853
      %v1862 = vld [vmem:[%s9] sm:$0xff]
      %v1863 = vld [vmem:[%s9 + $0x8] sm:$0xff]
      %v1864 = vld [vmem:[%s9 + $0x10] sm:$0xff]
      %v1865 = vld [vmem:[%s9 + $0x18] sm:$0xff]
      %v1866 = vperm.slane %v1304, 3
      %v1868 = vsel %vm654, %v1860, 0
      %v1871 = vsel %vm654, %v1861, 0
      %1873 = vmatpush.msra.mxu0 0.0
      %1874 = vmatpush.msra.mxu0 0.0
      %1875 = vmatpush.msra.mxu0 0.0
      %1876 = vmatpush.msra.mxu0 0.0
      %1877 = vmatpush.msra.mxu0 0.0
      %1878 = vmatpush.msra.mxu0 0.0
      %1879 = vmatpush.msra.mxu0 0.0
      %1880 = vmatpush.msra.mxu0 0.0
      %1881 = vmatpush.msra.mxu0 0.0
      %1882 = vmatpush.msra.mxu0 0.0
      %1883 = vmatpush.msra.mxu0 0.0
      %1884 = vmatpush.msra.mxu0 0.0
      %1885 = vmatpush.msra.mxu0 %v1865
      %1886 = vmatpush.msra.mxu0 %v1864
      %1887 = vmatpush.msra.mxu0 %v1863
      %1888 = vmatpush.msra.mxu0 %v1862
      %1889 = vmatmul.f32.gmra.mxu0 %v1868
      %v1890 = vpop.f32.mrf.mxu0
      %v1891 = vadd.f32 %v1866, %v1890
      %1892 = vmatmul.f32.gmra.mxu0 %v1871
      %v1893 = vpop.f32.mrf.mxu0
      %v1894 = vadd.f32 %v1866, %v1893
      %1895 = vdwg.mxu0
      %v1896 = vadd.f32 %v1302, %v1891
      %v1897 = vadd.f32 %v1303, %v1894
      %v1898 = vld [vmem:[%s12] sm:$0x3]
      %v1899 = vsel %vm654, %v1896, 0.0
      %1900 = vadd.xlane.f32.xlu0 %v1899
      %v1901 = vpop.xlane.xlu0 %1900
      %v1902 = vsel %vm654, %v1897, 0.0
      %1903 = vadd.xlane.f32.xlu0 %v1902
      %v1904 = vpop.xlane.xlu0 %1903
      %v1905 = vmul.f32 %v1901, %v1259
      %v1906 = vmul.f32 %v1904, %v1259
      %v1907 = vsub.f32 %v1896, %v1905
      %v1908 = vsub.f32 %v1897, %v1906
      %v1909 = vmul.f32 %v1907, %v1907
      %v1910 = vmul.f32 %v1908, %v1908
      %v1911 = vsel %vm654, %v1909, 0.0
      %1912 = vadd.xlane.f32.xlu0 %v1911
      %v1913 = vpop.xlane.xlu0 %1912
      %v1914 = vsel %vm654, %v1910, 0.0
      %1915 = vadd.xlane.f32.xlu0 %v1914
      %v1916 = vpop.xlane.xlu0 %1915
      %v1917 = vmul.f32 %v1913, %v1259
      %v1918 = vmul.f32 %v1916, %v1259
      %v1919 = vadd.f32 %v1917, 1e-05
      %v1920 = vadd.f32 %v1918, 1e-05
      %v1921 = vrsqrt.pop %v1919
      %v1922 = vmul.f32 %v1921, %v1919
      %v1923 = vmul.f32 %v1922, %v1921
      %v1924 = vmul.f32 0.5, %v1923
      %v1925 = vsub.f32 1.5, %v1924
      %v1926 = vmul.f32 %v1921, %v1925
      %vm1927 = vweird.f32 %v1919
      %vm1928 = vweird.f32 %v1921
      %vm1929 = vmor %vm1927, %vm1928
      %v1930 = vsel %vm1929, %v1921, %v1926
      %v1931 = vrsqrt.pop %v1920
      %v1932 = vmul.f32 %v1931, %v1920
      %v1933 = vmul.f32 %v1932, %v1931
      %v1934 = vmul.f32 0.5, %v1933
      %v1935 = vsub.f32 1.5, %v1934
      %v1936 = vmul.f32 %v1931, %v1935
      %vm1937 = vweird.f32 %v1920
      %vm1938 = vweird.f32 %v1931
      %vm1939 = vmor %vm1937, %vm1938
      %v1940 = vsel %vm1939, %v1931, %v1936
      %v1941 = vmul.f32 %v1907, %v1930
      %v1942 = vmul.f32 %v1908, %v1940
      %v1943 = vperm.slane %v1898, 0
      %v1944 = vmul.f32 %v1941, %v1943
      %v1945 = vmul.f32 %v1942, %v1943
      %v1946 = vperm.slane %v1898, 1
      %v1947 = vadd.f32 %v1944, %v1946
      %v1948 = vadd.f32 %v1945, %v1946
      %v1949 = vld [vmem:[%s13] sm:$0xff]
      %v1950 = vld [vmem:[%s13 + $0x8] sm:$0xff]
      %v1951 = vld [vmem:[%s13 + $0x10] sm:$0xff]
      %v1952 = vld [vmem:[%s13 + $0x18] sm:$0xff]
      %v1953 = vld [vmem:[%s14] sm:$0x1]
      %v1955 = vperm.slane %v1953, 0
      %v1958 = vsel %vm654, %v1947, 0
      %v1961 = vsel %vm654, %v1948, 0
      %1963 = vmatpush.msra.mxu0 0.0
      %1964 = vmatpush.msra.mxu0 0.0
      %1965 = vmatpush.msra.mxu0 0.0
      %1966 = vmatpush.msra.mxu0 0.0
      %1967 = vmatpush.msra.mxu0 0.0
      %1968 = vmatpush.msra.mxu0 0.0
      %1969 = vmatpush.msra.mxu0 0.0
      %1970 = vmatpush.msra.mxu0 0.0
      %1971 = vmatpush.msra.mxu0 0.0
      %1972 = vmatpush.msra.mxu0 0.0
      %1973 = vmatpush.msra.mxu0 0.0
      %1974 = vmatpush.msra.mxu0 0.0
      %1975 = vmatpush.msra.mxu0 %v1952
      %1976 = vmatpush.msra.mxu0 %v1951
      %1977 = vmatpush.msra.mxu0 %v1950
      %1978 = vmatpush.msra.mxu0 %v1949
      %1979 = vmatmul.f32.gmra.mxu0 %v1958
      %v1980 = vpop.f32.mrf.mxu0
      %v1981 = vadd.f32 %v1955, %v1980
      %1982 = vmatmul.f32.gmra.mxu0 %v1961
      %v1983 = vpop.f32.mrf.mxu0
      %v1984 = vadd.f32 %v1955, %v1983
      %1985 = vdwg.mxu0
      %vm1986 = vcmask 31744
      %v1987 = vsel %vm1986, %v1981, -inf
      %1988 = vmax.xlane.f32.xlu0 %v1987
      %v1989 = vpop.xlane.xlu0 %1988
      %v1990 = vsel %vm1986, %v1984, -inf
      %1991 = vmax.xlane.f32.xlu0 %v1990
      %v1992 = vpop.xlane.xlu0 %1991
      %vm1993 = vcmp.ge.f32.partialorder %v1981, %v1989
      %vm1994 = vcmp.ge.f32.partialorder %v1984, %v1992
      %v1995 = vsel %vm1993, -1e+30, %v1981
      %v1996 = vsel %vm1994, -1e+30, %v1984
      %v1997 = vsel %vm1986, %v1995, -inf
      %1998 = vmax.xlane.f32.xlu0 %v1997
      %v1999 = vpop.xlane.xlu0 %1998
      %v2000 = vsel %vm1986, %v1996, -inf
      %2001 = vmax.xlane.f32.xlu0 %v2000
      %v2002 = vpop.xlane.xlu0 %2001
      %vm2003 = vcmp.ge.f32.partialorder %v1981, %v1999
      %vm2004 = vcmp.ge.f32.partialorder %v1984, %v2002
      %v2005 = vsel %vm2003, %v1981, -1e+30
      %v2006 = vsel %vm2004, %v1984, -1e+30
      %v2007 = vsel %vm1986, %v2005, -inf
      %2008 = vmax.xlane.f32.xlu0 %v2007
      %v2009 = vpop.xlane.xlu0 %2008
      %v2010 = vsel %vm1986, %v2006, -inf
      %2011 = vmax.xlane.f32.xlu0 %v2010
      %v2012 = vpop.xlane.xlu0 %2011
      %v2013 = vsub.f32 %v2005, %v2009
      %v2014 = vsub.f32 %v2006, %v2012
      %v2015 = vmul.f32 %v2013, 1.442695
      %v2016 = vpow.pop %v2015
      %v2017 = vmul.f32 %v2014, 1.442695
      %v2018 = vpow.pop %v2017
      %v2019 = vsel %vm2003, %v2016, 0.0
      %v2020 = vsel %vm2004, %v2018, 0.0
      %v2021 = vsel %vm1986, %v2019, 0.0
      %2022 = vadd.xlane.f32.xlu0 %v2021
      %v2023 = vpop.xlane.xlu0 %2022
      %v2024 = vsel %vm1986, %v2020, 0.0
      %2025 = vadd.xlane.f32.xlu0 %v2024
      %v2026 = vpop.xlane.xlu0 %2025
      %v2027 = vrcp.pop %v2023
      %v2028 = vmul.f32 %v2023, %v2027
      %v2029 = vsub.f32 1.0, %v2028
      %v2030 = vmul.f32 %v2027, %v2029
      %v2031 = vadd.f32 %v2027, %v2030
      %vm2032 = vweird.f32 %v2023
      %vm2033 = vweird.f32 %v2027
      %vm2034 = vmor %vm2032, %vm2033
      %v2035 = vsel %vm2034, %v2027, %v2031
      %v2036 = vand.u32 2147483647, %v2023
      %vm2037 = vcmp.eq.f32.partialorder %v2036, 8.507059e+37
      %v2038 = vand.u32 %v2023, 2147483648
      %v2039 = vor.u32 1.1754944e-38, %v2038
      %v2040 = vsel %vm2037, %v2039, %v2035
      %v2041 = vmul.f32 %v2019, %v2040
      %v2042 = vrcp.pop %v2026
      %v2043 = vmul.f32 %v2026, %v2042
      %v2044 = vsub.f32 1.0, %v2043
      %v2045 = vmul.f32 %v2042, %v2044
      %v2046 = vadd.f32 %v2042, %v2045
      %vm2047 = vweird.f32 %v2026
      %vm2048 = vweird.f32 %v2042
      %vm2049 = vmor %vm2047, %vm2048
      %v2050 = vsel %vm2049, %v2042, %v2046
      %v2051 = vand.u32 2147483647, %v2026
      %vm2052 = vcmp.eq.f32.partialorder %v2051, 8.507059e+37
      %v2053 = vand.u32 %v2026, 2147483648
      %v2054 = vor.u32 1.1754944e-38, %v2053
      %v2055 = vsel %vm2052, %v2054, %v2050
      %v2056 = vmul.f32 %v2020, %v2055
      %v2057 = vld [vmem:[%s16] sm:$0xff]
      %v2058 = vld [vmem:[%s16 + $0x8] sm:$0xff]
      %v2059 = vld [vmem:[%s16 + $0x10] sm:$0xff]
      %v2060 = vld [vmem:[%s16 + $0x18] sm:$0xff]
      %v2061 = vld [vmem:[%s16 + $0x20] sm:$0xff]
      %v2062 = vld [vmem:[%s16 + $0x28] sm:$0xff]
      %v2063 = vld [vmem:[%s16 + $0x30] sm:$0xff]
      %v2064 = vld [vmem:[%s16 + $0x38] sm:$0xff]
      %v2065 = vld [vmem:[%s17] sm:$0x3]
      %v2067 = vperm.slane %v2065, 0
      %v2068 = vperm.slane %v2065, 1
      %2071 = vmatpush.msra.mxu0 0.0
      %2072 = vmatpush.msra.mxu0 0.0
      %2073 = vmatpush.msra.mxu0 0.0
      %2074 = vmatpush.msra.mxu0 0.0
      %2075 = vmatpush.msra.mxu0 0.0
      %2076 = vmatpush.msra.mxu0 0.0
      %2077 = vmatpush.msra.mxu0 0.0
      %2078 = vmatpush.msra.mxu0 0.0
      %2079 = vmatpush.msra.mxu0 0.0
      %2080 = vmatpush.msra.mxu0 0.0
      %2081 = vmatpush.msra.mxu0 0.0
      %2082 = vmatpush.msra.mxu0 0.0
      %2083 = vmatpush.msra.mxu0 %v2063
      %2084 = vmatpush.msra.mxu0 %v2061
      %2085 = vmatpush.msra.mxu0 %v2059
      %2086 = vmatpush.msra.mxu0 %v2057
      %2087 = vmatmul.f32.gmra.mxu0 %v1958
      %v2088 = vpop.f32.mrf.mxu0
      %v2089 = vadd.f32 %v2067, %v2088
      %2090 = vmatmul.f32.gmra.mxu0 %v1961
      %v2091 = vpop.f32.mrf.mxu0
      %v2092 = vadd.f32 %v2067, %v2091
      %2093 = vdwg.mxu0
      %2094 = vmatpush.msra.mxu0 0.0
      %2095 = vmatpush.msra.mxu0 0.0
      %2096 = vmatpush.msra.mxu0 0.0
      %2097 = vmatpush.msra.mxu0 0.0
      %2098 = vmatpush.msra.mxu0 0.0
      %2099 = vmatpush.msra.mxu0 0.0
      %2100 = vmatpush.msra.mxu0 0.0
      %2101 = vmatpush.msra.mxu0 0.0
      %2102 = vmatpush.msra.mxu0 0.0
      %2103 = vmatpush.msra.mxu0 0.0
      %2104 = vmatpush.msra.mxu0 0.0
      %2105 = vmatpush.msra.mxu0 0.0
      %2106 = vmatpush.msra.mxu0 %v2064
      %2107 = vmatpush.msra.mxu0 %v2062
      %2108 = vmatpush.msra.mxu0 %v2060
      %2109 = vmatpush.msra.mxu0 %v2058
      %2110 = vmatmul.f32.gmra.mxu0 %v1958
      %v2111 = vpop.f32.mrf.mxu0
      %v2112 = vadd.f32 %v2068, %v2111
      %2113 = vmatmul.f32.gmra.mxu0 %v1961
      %v2114 = vpop.f32.mrf.mxu0
      %v2115 = vadd.f32 %v2068, %v2114
      %2116 = vdwg.mxu0
      %v2117 = vmax.f32 %v2089, 0.0
      %v2118 = vmax.f32 %v2112, 0.0
      %v2119 = vmax.f32 %v2092, 0.0
      %v2120 = vmax.f32 %v2115, 0.0
      %v2121 = vld [vmem:[%s15] sm:$0xff]
      %2123 = vst [vmem:[#allocation1] ss:$2 sm:$0xff] %v2121
      %v2124 = vld.sshfl [vmem:[#allocation1] sm:$0xff pattern:$0x75316420]
      %v2125 = vld.sshfl [vmem:[#allocation1 + $0x8] sm:$0xff pattern:$0x75316420]
      %v2127 = vsel %vm1986, %v2041, 0
      %v2130 = vsel %vm1986, %v2056, 0
      %vm2132 = vcmask 1043456
      %v2133 = vsel %vm2132, %v2124, 0
      %v2135 = vsel %vm2132, %v2125, 0
      %2137 = vmatpush.msra.mxu0 0.0
      %2138 = vmatpush.msra.mxu0 0.0
      %2139 = vmatpush.msra.mxu0 0.0
      %2140 = vmatpush.msra.mxu0 0.0
      %2141 = vmatpush.msra.mxu0 0.0
      %2142 = vmatpush.msra.mxu0 0.0
      %2143 = vmatpush.msra.mxu0 0.0
      %2144 = vmatpush.msra.mxu0 0.0
      %2145 = vmatpush.msra.mxu0 0.0
      %2146 = vmatpush.msra.mxu0 0.0
      %2147 = vmatpush.msra.mxu0 0.0
      %2148 = vmatpush.msra.mxu0 0.0
      %2149 = vmatpush.msra.mxu0 0.0
      %2150 = vmatpush.msra.mxu0 0.0
      %2151 = vmatpush.msra.mxu0 0.0
      %2152 = vmatpush.msra.mxu0 %v2133
      %2153 = vmatmul.f32.gmra.mxu0 %v2127
      %v2154 = vpop.f32.mrf.mxu0
      %v2155 = vadd.f32 0.0, %v2154
      %2156 = vmatmul.f32.gmra.mxu0 %v2130
      %v2157 = vpop.f32.mrf.mxu0
      %v2158 = vadd.f32 0.0, %v2157
      %2159 = vdwg.mxu0
      %2160 = vmatpush.msra.mxu0 0.0
      %2161 = vmatpush.msra.mxu0 0.0
      %2162 = vmatpush.msra.mxu0 0.0
      %2163 = vmatpush.msra.mxu0 0.0
      %2164 = vmatpush.msra.mxu0 0.0
      %2165 = vmatpush.msra.mxu0 0.0
      %2166 = vmatpush.msra.mxu0 0.0
      %2167 = vmatpush.msra.mxu0 0.0
      %2168 = vmatpush.msra.mxu0 0.0
      %2169 = vmatpush.msra.mxu0 0.0
      %2170 = vmatpush.msra.mxu0 0.0
      %2171 = vmatpush.msra.mxu0 0.0
      %2172 = vmatpush.msra.mxu0 0.0
      %2173 = vmatpush.msra.mxu0 0.0
      %2174 = vmatpush.msra.mxu0 0.0
      %2175 = vmatpush.msra.mxu0 %v2135
      %2176 = vmatmul.f32.gmra.mxu0 %v2127
      %v2177 = vpop.f32.mrf.mxu0
      %v2178 = vadd.f32 0.0, %v2177
      %2179 = vmatmul.f32.gmra.mxu0 %v2130
      %v2180 = vpop.f32.mrf.mxu0
      %v2181 = vadd.f32 0.0, %v2180
      %2182 = vdwg.mxu0
      %v2183 = vmul.f32 %v2117, %v2155
      %v2184 = vmul.f32 %v2118, %v2178
      %v2185 = vmul.f32 %v2119, %v2158
      %v2186 = vmul.f32 %v2120, %v2181
      %v2187 = vld [vmem:[%s18] sm:$0xff]
      %v2188 = vld [vmem:[%s18 + $0x8] sm:$0xff]
      %v2189 = vld [vmem:[%s18 + $0x10] sm:$0xff]
      %v2190 = vld [vmem:[%s18 + $0x18] sm:$0xff]
      %v2191 = vld [vmem:[%s18 + $0x20] sm:$0xff]
      %v2192 = vld [vmem:[%s18 + $0x28] sm:$0xff]
      %v2193 = vld [vmem:[%s18 + $0x30] sm:$0xff]
      %v2194 = vld [vmem:[%s18 + $0x38] sm:$0xff]
      %v2195 = vld [vmem:[%s18 + $0x40] sm:$0xff]
      %v2196 = vld [vmem:[%s18 + $0x48] sm:$0xff]
      %v2197 = vld [vmem:[%s18 + $0x50] sm:$0xff]
      %v2198 = vld [vmem:[%s18 + $0x58] sm:$0xff]
      %v2199 = vld [vmem:[%s18 + $0x60] sm:$0xff]
      %v2200 = vld [vmem:[%s18 + $0x68] sm:$0xff]
      %v2201 = vld [vmem:[%s18 + $0x70] sm:$0xff]
      %v2202 = vld [vmem:[%s18 + $0x78] sm:$0xff]
      %v2203 = vld [vmem:[%s18 + $0x80] sm:$0xff]
      %v2204 = vld [vmem:[%s18 + $0x88] sm:$0xff]
      %v2205 = vld [vmem:[%s18 + $0x90] sm:$0xff]
      %v2206 = vld [vmem:[%s18 + $0x98] sm:$0xff]
      %v2207 = vld [vmem:[%s18 + $0xa0] sm:$0xff]
      %v2208 = vld [vmem:[%s18 + $0xa8] sm:$0xff]
      %v2209 = vld [vmem:[%s18 + $0xb0] sm:$0xff]
      %v2210 = vld [vmem:[%s18 + $0xb8] sm:$0xff]
      %v2211 = vld [vmem:[%s18 + $0xc0] sm:$0xff]
      %v2212 = vld [vmem:[%s18 + $0xc8] sm:$0xff]
      %v2213 = vld [vmem:[%s18 + $0xd0] sm:$0xff]
      %v2214 = vld [vmem:[%s18 + $0xd8] sm:$0xff]
      %v2215 = vld [vmem:[%s18 + $0xe0] sm:$0xff]
      %v2216 = vld [vmem:[%s18 + $0xe8] sm:$0xff]
      %v2217 = vld [vmem:[%s18 + $0xf0] sm:$0xff]
      %v2218 = vld [vmem:[%s18 + $0xf8] sm:$0xff]
      %v2219 = vld [vmem:[%s19] sm:$0xf]
      %v2221 = vsel %vm2132, %v2219, 0
      %2223 = vmatpush.msra.mxu0 0.0
      %2224 = vmatpush.msra.mxu0 0.0
      %2225 = vmatpush.msra.mxu0 0.0
      %2226 = vmatpush.msra.mxu0 0.0
      %2227 = vmatpush.msra.mxu0 0.0
      %2228 = vmatpush.msra.mxu0 0.0
      %2229 = vmatpush.msra.mxu0 0.0
      %2230 = vmatpush.msra.mxu0 0.0
      %2231 = vmatpush.msra.mxu0 0.0
      %2232 = vmatpush.msra.mxu0 0.0
      %2233 = vmatpush.msra.mxu0 0.0
      %2234 = vmatpush.msra.mxu0 0.0
      %2235 = vmatpush.msra.mxu0 0.0
      %2236 = vmatpush.msra.mxu0 0.0
      %2237 = vmatpush.msra.mxu0 0.0
      %2238 = vmatpush.msra.mxu0 %v2221
      %2239 = vmatmul.f32.gmra.mxu0 %v2127
      %v2240 = vpop.f32.mrf.mxu0
      %v2241 = vadd.f32 0.0, %v2240
      %2242 = vmatmul.f32.gmra.mxu0 %v2130
      %v2243 = vpop.f32.mrf.mxu0
      %v2244 = vadd.f32 0.0, %v2243
      %2245 = vdwg.mxu0
      %2246 = vmatpush.msra.mxu0 %v2202
      %2247 = vmatpush.msra.mxu0 %v2201
      %2248 = vmatpush.msra.mxu0 %v2200
      %2249 = vmatpush.msra.mxu0 %v2199
      %2250 = vmatpush.msra.mxu0 %v2198
      %2251 = vmatpush.msra.mxu0 %v2197
      %2252 = vmatpush.msra.mxu0 %v2196
      %2253 = vmatpush.msra.mxu0 %v2195
      %2254 = vmatpush.msra.mxu0 %v2194
      %2255 = vmatpush.msra.mxu0 %v2193
      %2256 = vmatpush.msra.mxu0 %v2192
      %2257 = vmatpush.msra.mxu0 %v2191
      %2258 = vmatpush.msra.mxu0 %v2190
      %2259 = vmatpush.msra.mxu0 %v2189
      %2260 = vmatpush.msra.mxu0 %v2188
      %2261 = vmatpush.msra.mxu0 %v2187
      %2262 = vmatmul.f32.gmra.mxu0 %v2183
      %v2263 = vpop.f32.mrf.mxu0
      %v2264 = vadd.f32 %v2241, %v2263
      %2265 = vmatmul.f32.gmra.mxu0 %v2185
      %v2266 = vpop.f32.mrf.mxu0
      %v2267 = vadd.f32 %v2244, %v2266
      %2268 = vdwg.mxu0
      %2269 = vmatpush.msra.mxu0 %v2218
      %2270 = vmatpush.msra.mxu0 %v2217
      %2271 = vmatpush.msra.mxu0 %v2216
      %2272 = vmatpush.msra.mxu0 %v2215
      %2273 = vmatpush.msra.mxu0 %v2214
      %2274 = vmatpush.msra.mxu0 %v2213
      %2275 = vmatpush.msra.mxu0 %v2212
      %2276 = vmatpush.msra.mxu0 %v2211
      %2277 = vmatpush.msra.mxu0 %v2210
      %2278 = vmatpush.msra.mxu0 %v2209
      %2279 = vmatpush.msra.mxu0 %v2208
      %2280 = vmatpush.msra.mxu0 %v2207
      %2281 = vmatpush.msra.mxu0 %v2206
      %2282 = vmatpush.msra.mxu0 %v2205
      %2283 = vmatpush.msra.mxu0 %v2204
      %2284 = vmatpush.msra.mxu0 %v2203
      %2285 = vmatmul.f32.gmra.mxu0 %v2184
      %v2286 = vpop.f32.mrf.mxu0
      %v2287 = vadd.f32 %v2264, %v2286
      %2288 = vmatmul.f32.gmra.mxu0 %v2186
      %v2289 = vpop.f32.mrf.mxu0
      %v2290 = vadd.f32 %v2267, %v2289
      %2291 = vdwg.mxu0
      %v2292 = vadd.f32 %v1947, %v2287
      %v2293 = vadd.f32 %v1948, %v2290
      %2294 = vst.msk [vmem:[%s643] sm:$0xff] %vm654, %v2292
      %2295 = vst.msk [vmem:[%s643 + $0x8] sm:$0xff] %vm654, %v2293
      %p2296 = scmp.lt.s32.totalorder %s31, 1
      %s2297 = scalar_select %p2296, %s31, 1
      %s2298 = smul.addr %s2297, 2
      %s2299 = smul.addr %s2298, 8
      %s2300 = scalar_lea.vmem %s20, %s2299
      // Predicated region
      $region101: #{share_de_layer_forward.1} parent=99 // pred_check
        %p2301 = pneg %p479
      $region102: #{share_de_layer_forward.1} parent=99 // pred_check_branch
        %2303 = sbr.rel (%p2301) target = $region104
      $region103: #{share_de_layer_forward.1} parent=99 // pred_region
        _
      $region104: #{share_de_layer_forward.1} parent=99 // pred_fallthru
        _
    $region100: #{share_de_layer_forward.1} parent=5 // pred_fallthru
      _
    %p2304 = scmp.le.s32.totalorder 2, %s26
    // Predicated region
    $region105: #{share_de_layer_forward.1} parent=5 // pred_check
      %p2305 = pneg %p2304
    $region106: #{share_de_layer_forward.1} parent=5 // pred_check_branch
      %2307 = sbr.rel (%p2305) target = $region108
    $region107: #{share_de_layer_forward.1} parent=5 // pred_region
      %s2308 = ssub.s32 %s26, 2
      // Predicated region
      $region109: #{share_de_layer_forward.1} parent=107 // pred_check
        %p2309 = pneg %p485
      $region110: #{share_de_layer_forward.1} parent=107 // pred_check_branch
        %2311 = sbr.rel (%p2309) target = $region112
      $region111: #{share_de_layer_forward.1} parent=107 // pred_region
        %p2312 = scmp.lt.s32.totalorder %s32, 1
        %s2313 = scalar_select %p2312, %s32, 1
        %s2314 = smul.addr %s2313, 2
        %s2315 = smul.addr %s2314, 8
        %s2316 = scalar_lea.vmem %s20, %s2315
      $region112: #{share_de_layer_forward.1} parent=107 // pred_fallthru
        _
    $region108: #{share_de_layer_forward.1} parent=5 // pred_fallthru
      _
  $region6: #{share_de_layer_forward.1} parent=0 // loop_footer
    %s30 = sadd.s32 1, %s26
  $region7: #{share_de_layer_forward.1} parent=0 // loop_footer_branch
    %25 = sbr.rel target = $region3
  $region8: #{share_de_layer_forward.1} parent=0 // loop_exit
    _

</llo_original>
